<compile_context>
chip_gen: v7x
topology: tpu7x:2x2x1
jax: 0.10.0
libtpu: 0.0.40
codegen_flags: <defaults>
</compile_context>

<pallas_src>
import functools

import jax
import jax.numpy as jnp
import numpy as np
from jax.experimental import pallas as pl
from jax.experimental.pallas import tpu as pltpu


def _reflect_pad_hw(x):
    """ReflectionPad2d(1) on an (H, W, C) tile, built from static slices in-kernel."""
    H, W = x.shape[0], x.shape[1]
    x = jnp.concatenate([x[1:2, :, :], x, x[H - 2:H - 1, :, :]], axis=0)
    x = jnp.concatenate([x[:, 1:2, :], x, x[:, W - 2:W - 1, :]], axis=1)
    return x


def _conv3x3(x, w_mat, b, compute_dtype):
    """3x3 'same' conv with reflection padding.

    x: (H, W, Cin) f32, w_mat: (9*Cin, Cout), b: (1, Cout). Returns (H, W, Cout) f32.
    """
    H, W, Cin = x.shape
    Cout = w_mat.shape[-1]
    xp = _reflect_pad_hw(x)                                     # (H+2, W+2, Cin)
    # im2col: stack the 9 taps on the lane axis -> ONE K=9*Cin MXU contraction.
    cols = [xp[di:di + H, dj:dj + W, :] for di in range(3) for dj in range(3)]
    patches = jnp.concatenate(cols, axis=-1).reshape(H * W, 9 * Cin)
    y = jax.lax.dot_general(
        patches.astype(compute_dtype), w_mat.astype(compute_dtype),
        (((1,), (0,)), ((), ())),
        preferred_element_type=jnp.float32)                     # (H*W, Cout) f32 acc
    y = y + b.astype(jnp.float32)                               # bias hoisted out of the contraction
    return y.reshape(H, W, Cout)


def residual_block_kernel(x_ref, w1_ref, b1_ref, w2_ref, b2_ref, out_ref, *,
                          compute_dtype):
    x = x_ref[0].astype(jnp.float32)                            # (H, W, C)
    h = _conv3x3(x, w1_ref[...], b1_ref[...], compute_dtype)    # stays on-chip (VMEM/vregs)
    y = _conv3x3(h, w2_ref[...], b2_ref[...], compute_dtype)
    out_ref[0] = (y + x).astype(out_ref.dtype)                  # fused residual add


@functools.partial(jax.jit, static_argnames=("compute_dtype",))
def residual_block_forward(x_nchw, w1, b1, w2, b2, compute_dtype=jnp.float32):
    """x_nchw: (N, C, H, W); weights (3, 3, Cin, Cout); biases (1, Cout)."""
    N, C, H, W = x_nchw.shape
    Cout = w1.shape[-1]
    x = jnp.transpose(x_nchw, (0, 2, 3, 1))                     # NCHW -> NHWC
    w1m = w1.reshape(9 * C, Cout)                               # tap-major: matches im2col order
    w2m = w2.reshape(9 * Cout, Cout)

    kernel = functools.partial(residual_block_kernel, compute_dtype=compute_dtype)
    y = pl.pallas_call(
        kernel,
        out_shape=jax.ShapeDtypeStruct((N, H, W, Cout), x.dtype),
        grid_spec=pltpu.PrefetchScalarGridSpec(
            num_scalar_prefetch=0,
            grid=(N,),
            in_specs=[
                pl.BlockSpec((1, H, W, C), lambda b: (b, 0, 0, 0)),
                pl.BlockSpec((9 * C, Cout), lambda b: (0, 0)),
                pl.BlockSpec((1, Cout), lambda b: (0, 0)),
                pl.BlockSpec((9 * Cout, Cout), lambda b: (0, 0)),
                pl.BlockSpec((1, Cout), lambda b: (0, 0)),
            ],
            out_specs=pl.BlockSpec((1, H, W, Cout), lambda b: (b, 0, 0, 0)),
        ),
        compiler_params=pltpu.CompilerParams(
            dimension_semantics=("parallel",)),
    )(x, w1m, b1, w2m, b2)
    return jnp.transpose(y, (0, 3, 1, 2))                       # NHWC -> NCHW


def init_params(key, inplanes, planes, kernel_size=3):
    k1, k2, k3, k4 = jax.random.split(key, 4)
    # deterministic kaiming-uniform-ish init (shapes match nn.Conv2d params)
    fan_in1 = inplanes * kernel_size * kernel_size
    fan_in2 = planes * kernel_size * kernel_size
    bound1 = 1.0 / np.sqrt(fan_in1)
    bound2 = 1.0 / np.sqrt(fan_in2)
    w1 = jax.random.uniform(k1, (kernel_size, kernel_size, inplanes, planes),
                            jnp.float32, -bound1, bound1)
    b1 = jax.random.uniform(k2, (1, planes), jnp.float32, -bound1, bound1)
    w2 = jax.random.uniform(k3, (kernel_size, kernel_size, planes, planes),
                            jnp.float32, -bound2, bound2)
    b2 = jax.random.uniform(k4, (1, planes), jnp.float32, -bound2, bound2)
    return w1, b1, w2, b2


def _reference(x_nchw, w1, b1, w2, b2):
    """Pure-JAX reference (lax conv) for a sanity check."""
    def conv(x, w, b):
        xp = jnp.pad(x, ((0, 0), (0, 0), (1, 1), (1, 1)), mode="reflect")
        w_oihw = jnp.transpose(w, (3, 2, 0, 1))
        y = jax.lax.conv_general_dilated(
            xp, w_oihw, window_strides=(1, 1), padding="VALID",
            dimension_numbers=("NCHW", "OIHW", "NCHW"))
        return y + b.reshape(1, -1, 1, 1)
    h = conv(x_nchw, w1, b1)
    y = conv(h, w2, b2)
    return y + x_nchw


if __name__ == "__main__":
    N, C, H, W = 2, 4, 16, 16          # inplanes == planes (required for the residual add)
    key = jax.random.PRNGKey(0)
    kx, kp = jax.random.split(key)
    x = jax.random.normal(kx, (N, C, H, W), jnp.float32)
    w1, b1, w2, b2 = init_params(kp, C, C)

    # f32 MXU path (exact check against the lax.conv reference).
    out = residual_block_forward(x, w1, b1, w2, b2)
    out = jax.block_until_ready(out)

    ref = _reference(x, w1, b1, w2, b2)
    assert out.shape == (N, C, H, W)
    assert np.allclose(np.asarray(out), np.asarray(ref), atol=1e-4, rtol=1e-4)

    # bf16 MXU inputs / f32 accumulate (v6e/v7x fast path), looser tolerance.
    out_bf16 = residual_block_forward(x, w1, b1, w2, b2, compute_dtype=jnp.bfloat16)
    out_bf16 = jax.block_until_ready(out_bf16)
    assert np.allclose(np.asarray(out_bf16), np.asarray(ref), atol=1e-1, rtol=1e-1)

    print("KERNEL_OK")
</pallas_src>

<mosaic_0001>
module attributes {stable_mosaic.version = 11 : i64} {
  func.func @residual_block_kernel(%arg0: i32, %arg1: memref<1x16x16x4xf32, #tpu.memory_space<vmem>>, %arg2: memref<36x4xf32, #tpu.memory_space<vmem>>, %arg3: memref<1x4xf32, #tpu.memory_space<vmem>>, %arg4: memref<36x4xf32, #tpu.memory_space<vmem>>, %arg5: memref<1x4xf32, #tpu.memory_space<vmem>>, %arg6: memref<1x16x16x4xf32, #tpu.memory_space<vmem>>) attributes {dimension_semantics = [#tpu.dimension_semantics<parallel>], iteration_bounds = array<i64: 2>, scalar_prefetch = 0 : i64, scratch_operands = 0 : i64, tpu.core_type = #tpu.core_type<tc>, window_params = [{transform_indices = @transform_0, window_bounds = array<i64: 1, 16, 16, 4>}, {pipeline_mode = #tpu.pipeline_mode<synchronous>, transform_indices = @transform_1, window_bounds = array<i64: 36, 4>}, {pipeline_mode = #tpu.pipeline_mode<synchronous>, transform_indices = @transform_2, window_bounds = array<i64: 1, 4>}, {pipeline_mode = #tpu.pipeline_mode<synchronous>, transform_indices = @transform_3, window_bounds = array<i64: 36, 4>}, {pipeline_mode = #tpu.pipeline_mode<synchronous>, transform_indices = @transform_4, window_bounds = array<i64: 1, 4>}, {transform_indices = @transform_5, window_bounds = array<i64: 1, 16, 16, 4>}]} {
    %c0 = arith.constant 0 : index
    %c0_0 = arith.constant 0 : index
    %c0_1 = arith.constant 0 : index
    %c0_2 = arith.constant 0 : index
    %0 = vector.load %arg1[%c0, %c0_0, %c0_1, %c0_2] : memref<1x16x16x4xf32, #tpu.memory_space<vmem>>, vector<1x16x16x4xf32>
    %1 = vector.shape_cast %0 : vector<1x16x16x4xf32> to vector<16x16x4xf32>
    %c0_3 = arith.constant 0 : index
    %c0_4 = arith.constant 0 : index
    %2 = vector.load %arg2[%c0_3, %c0_4] : memref<36x4xf32, #tpu.memory_space<vmem>>, vector<36x4xf32>
    %c0_5 = arith.constant 0 : index
    %c0_6 = arith.constant 0 : index
    %3 = vector.load %arg3[%c0_5, %c0_6] : memref<1x4xf32, #tpu.memory_space<vmem>>, vector<1x4xf32>
    %4 = vector.extract_strided_slice %1 {offsets = [1, 0, 0], sizes = [1, 16, 4], strides = [1, 1, 1]} : vector<16x16x4xf32> to vector<1x16x4xf32>
    %5 = vector.extract_strided_slice %1 {offsets = [14, 0, 0], sizes = [1, 16, 4], strides = [1, 1, 1]} : vector<16x16x4xf32> to vector<1x16x4xf32>
    %6 = tpu.concatenate %4, %1, %5 in 0 : vector<1x16x4xf32>, vector<16x16x4xf32>, vector<1x16x4xf32> -> vector<18x16x4xf32>
    %7 = vector.extract_strided_slice %6 {offsets = [0, 1, 0], sizes = [18, 1, 4], strides = [1, 1, 1]} : vector<18x16x4xf32> to vector<18x1x4xf32>
    %8 = vector.extract_strided_slice %6 {offsets = [0, 14, 0], sizes = [18, 1, 4], strides = [1, 1, 1]} : vector<18x16x4xf32> to vector<18x1x4xf32>
    %9 = tpu.concatenate %7, %6, %8 in 1 : vector<18x1x4xf32>, vector<18x16x4xf32>, vector<18x1x4xf32> -> vector<18x18x4xf32>
    %10 = vector.extract_strided_slice %9 {offsets = [0, 0, 0], sizes = [16, 16, 4], strides = [1, 1, 1]} : vector<18x18x4xf32> to vector<16x16x4xf32>
    %11 = vector.extract_strided_slice %9 {offsets = [0, 1, 0], sizes = [16, 16, 4], strides = [1, 1, 1]} : vector<18x18x4xf32> to vector<16x16x4xf32>
    %12 = vector.extract_strided_slice %9 {offsets = [0, 2, 0], sizes = [16, 16, 4], strides = [1, 1, 1]} : vector<18x18x4xf32> to vector<16x16x4xf32>
    %13 = vector.extract_strided_slice %9 {offsets = [1, 0, 0], sizes = [16, 16, 4], strides = [1, 1, 1]} : vector<18x18x4xf32> to vector<16x16x4xf32>
    %14 = vector.extract_strided_slice %9 {offsets = [1, 1, 0], sizes = [16, 16, 4], strides = [1, 1, 1]} : vector<18x18x4xf32> to vector<16x16x4xf32>
    %15 = vector.extract_strided_slice %9 {offsets = [1, 2, 0], sizes = [16, 16, 4], strides = [1, 1, 1]} : vector<18x18x4xf32> to vector<16x16x4xf32>
    %16 = vector.extract_strided_slice %9 {offsets = [2, 0, 0], sizes = [16, 16, 4], strides = [1, 1, 1]} : vector<18x18x4xf32> to vector<16x16x4xf32>
    %17 = vector.extract_strided_slice %9 {offsets = [2, 1, 0], sizes = [16, 16, 4], strides = [1, 1, 1]} : vector<18x18x4xf32> to vector<16x16x4xf32>
    %18 = vector.extract_strided_slice %9 {offsets = [2, 2, 0], sizes = [16, 16, 4], strides = [1, 1, 1]} : vector<18x18x4xf32> to vector<16x16x4xf32>
    %19 = tpu.concatenate %10, %11, %12, %13, %14, %15, %16, %17, %18 in 2 : vector<16x16x4xf32>, vector<16x16x4xf32>, vector<16x16x4xf32>, vector<16x16x4xf32>, vector<16x16x4xf32>, vector<16x16x4xf32>, vector<16x16x4xf32>, vector<16x16x4xf32>, vector<16x16x4xf32> -> vector<16x16x36xf32>
    %20 = vector.shape_cast %19 : vector<16x16x36xf32> to vector<256x36xf32>
    %cst = arith.constant dense<0.000000e+00> : vector<256x4xf32>
    %21 = tpu.matmul %20, %2, %cst {dimension_numbers = #tpu.dot_dimension_numbers<[1], [0], [0], [1], [0, 0, 1, 1], [], []>} : vector<256x36xf32>, vector<36x4xf32>, vector<256x4xf32> -> vector<256x4xf32>
    %22 = vector.broadcast %3 : vector<1x4xf32> to vector<256x4xf32>
    %23 = arith.addf %21, %22 : vector<256x4xf32>
    %24 = vector.shape_cast %23 : vector<256x4xf32> to vector<16x16x4xf32>
    %c0_7 = arith.constant 0 : index
    %c0_8 = arith.constant 0 : index
    %25 = vector.load %arg4[%c0_7, %c0_8] : memref<36x4xf32, #tpu.memory_space<vmem>>, vector<36x4xf32>
    %c0_9 = arith.constant 0 : index
    %c0_10 = arith.constant 0 : index
    %26 = vector.load %arg5[%c0_9, %c0_10] : memref<1x4xf32, #tpu.memory_space<vmem>>, vector<1x4xf32>
    %27 = vector.extract_strided_slice %24 {offsets = [1, 0, 0], sizes = [1, 16, 4], strides = [1, 1, 1]} : vector<16x16x4xf32> to vector<1x16x4xf32>
    %28 = vector.extract_strided_slice %24 {offsets = [14, 0, 0], sizes = [1, 16, 4], strides = [1, 1, 1]} : vector<16x16x4xf32> to vector<1x16x4xf32>
    %29 = tpu.concatenate %27, %24, %28 in 0 : vector<1x16x4xf32>, vector<16x16x4xf32>, vector<1x16x4xf32> -> vector<18x16x4xf32>
    %30 = vector.extract_strided_slice %29 {offsets = [0, 1, 0], sizes = [18, 1, 4], strides = [1, 1, 1]} : vector<18x16x4xf32> to vector<18x1x4xf32>
    %31 = vector.extract_strided_slice %29 {offsets = [0, 14, 0], sizes = [18, 1, 4], strides = [1, 1, 1]} : vector<18x16x4xf32> to vector<18x1x4xf32>
    %32 = tpu.concatenate %30, %29, %31 in 1 : vector<18x1x4xf32>, vector<18x16x4xf32>, vector<18x1x4xf32> -> vector<18x18x4xf32>
    %33 = vector.extract_strided_slice %32 {offsets = [0, 0, 0], sizes = [16, 16, 4], strides = [1, 1, 1]} : vector<18x18x4xf32> to vector<16x16x4xf32>
    %34 = vector.extract_strided_slice %32 {offsets = [0, 1, 0], sizes = [16, 16, 4], strides = [1, 1, 1]} : vector<18x18x4xf32> to vector<16x16x4xf32>
    %35 = vector.extract_strided_slice %32 {offsets = [0, 2, 0], sizes = [16, 16, 4], strides = [1, 1, 1]} : vector<18x18x4xf32> to vector<16x16x4xf32>
    %36 = vector.extract_strided_slice %32 {offsets = [1, 0, 0], sizes = [16, 16, 4], strides = [1, 1, 1]} : vector<18x18x4xf32> to vector<16x16x4xf32>
    %37 = vector.extract_strided_slice %32 {offsets = [1, 1, 0], sizes = [16, 16, 4], strides = [1, 1, 1]} : vector<18x18x4xf32> to vector<16x16x4xf32>
    %38 = vector.extract_strided_slice %32 {offsets = [1, 2, 0], sizes = [16, 16, 4], strides = [1, 1, 1]} : vector<18x18x4xf32> to vector<16x16x4xf32>
    %39 = vector.extract_strided_slice %32 {offsets = [2, 0, 0], sizes = [16, 16, 4], strides = [1, 1, 1]} : vector<18x18x4xf32> to vector<16x16x4xf32>
    %40 = vector.extract_strided_slice %32 {offsets = [2, 1, 0], sizes = [16, 16, 4], strides = [1, 1, 1]} : vector<18x18x4xf32> to vector<16x16x4xf32>
    %41 = vector.extract_strided_slice %32 {offsets = [2, 2, 0], sizes = [16, 16, 4], strides = [1, 1, 1]} : vector<18x18x4xf32> to vector<16x16x4xf32>
    %42 = tpu.concatenate %33, %34, %35, %36, %37, %38, %39, %40, %41 in 2 : vector<16x16x4xf32>, vector<16x16x4xf32>, vector<16x16x4xf32>, vector<16x16x4xf32>, vector<16x16x4xf32>, vector<16x16x4xf32>, vector<16x16x4xf32>, vector<16x16x4xf32>, vector<16x16x4xf32> -> vector<16x16x36xf32>
    %43 = vector.shape_cast %42 : vector<16x16x36xf32> to vector<256x36xf32>
    %cst_11 = arith.constant dense<0.000000e+00> : vector<256x4xf32>
    %44 = tpu.matmul %43, %25, %cst_11 {dimension_numbers = #tpu.dot_dimension_numbers<[1], [0], [0], [1], [0, 0, 1, 1], [], []>} : vector<256x36xf32>, vector<36x4xf32>, vector<256x4xf32> -> vector<256x4xf32>
    %45 = vector.broadcast %26 : vector<1x4xf32> to vector<256x4xf32>
    %46 = arith.addf %44, %45 : vector<256x4xf32>
    %47 = vector.shape_cast %46 : vector<256x4xf32> to vector<16x16x4xf32>
    %48 = arith.addf %47, %1 : vector<16x16x4xf32>
    %c0_12 = arith.constant 0 : index
    %c0_13 = arith.constant 0 : index
    %c0_14 = arith.constant 0 : index
    %c0_15 = arith.constant 0 : index
    %49 = vector.load %arg6[%c0_12, %c0_13, %c0_14, %c0_15] : memref<1x16x16x4xf32, #tpu.memory_space<vmem>>, vector<1x16x16x4xf32>
    %50 = vector.shape_cast %49 : vector<1x16x16x4xf32> to vector<16x16x4xf32>
    %51 = vector.shape_cast %48 : vector<16x16x4xf32> to vector<1x16x16x4xf32>
    tpu.vector_store %arg6[%c0_12, %c0_13, %c0_14, %c0_15], %51 {strides = array<i32>} : memref<1x16x16x4xf32, #tpu.memory_space<vmem>>, vector<1x16x16x4xf32>,
    return
  }
  func.func @transform_0(%arg0: i32) -> (i32, i32, i32, i32) {
    %c0_i32 = arith.constant 0 : i32
    %c0_i32_0 = arith.constant 0 : i32
    %c0_i32_1 = arith.constant 0 : i32
    %c0_i32_2 = arith.constant 0 : i32
    return %arg0, %c0_i32, %c0_i32_0, %c0_i32_1 : i32, i32, i32, i32
  }
  func.func @transform_1(%arg0: i32) -> (i32, i32) {
    %c0_i32 = arith.constant 0 : i32
    %c0_i32_0 = arith.constant 0 : i32
    %c0_i32_1 = arith.constant 0 : i32
    return %c0_i32, %c0_i32_0 : i32, i32
  }
  func.func @transform_2(%arg0: i32) -> (i32, i32) {
    %c0_i32 = arith.constant 0 : i32
    %c0_i32_0 = arith.constant 0 : i32
    %c0_i32_1 = arith.constant 0 : i32
    return %c0_i32, %c0_i32_0 : i32, i32
  }
  func.func @transform_3(%arg0: i32) -> (i32, i32) {
    %c0_i32 = arith.constant 0 : i32
    %c0_i32_0 = arith.constant 0 : i32
    %c0_i32_1 = arith.constant 0 : i32
    return %c0_i32, %c0_i32_0 : i32, i32
  }
  func.func @transform_4(%arg0: i32) -> (i32, i32) {
    %c0_i32 = arith.constant 0 : i32
    %c0_i32_0 = arith.constant 0 : i32
    %c0_i32_1 = arith.constant 0 : i32
    return %c0_i32, %c0_i32_0 : i32, i32
  }
  func.func @transform_5(%arg0: i32) -> (i32, i32, i32, i32) {
    %c0_i32 = arith.constant 0 : i32
    %c0_i32_0 = arith.constant 0 : i32
    %c0_i32_1 = arith.constant 0 : i32
    %c0_i32_2 = arith.constant 0 : i32
    return %arg0, %c0_i32, %c0_i32_0, %c0_i32_1 : i32, i32, i32, i32
  }
}

</mosaic_0001>

<llo_original>
// kernel: residual_block_forward.1
$region0: #{residual_block_forward.1}
  #allocation0 [shape = 'u32[]', space=smem, size = 0x4, offset = 0x4, fixed_abs, tag = 'smem constant byte address 0x4 - core index']
  #allocation1 [shape = 'u32[144,128]{1,0:T(1,128)}', space=vmem, size = 0x12000, scoped, tag = 'internal scratch']
  %s0 = inlined_call_operand.vmem [shape: f32[2,16,16,4], index: 0, kind: input, shape index: {}]
  %s1 = inlined_call_operand.vmem [shape: f32[36,4], index: 1, kind: input, shape index: {}]
  %s2 = inlined_call_operand.vmem [shape: f32[1,4], index: 2, kind: input, shape index: {}]
  %s3 = inlined_call_operand.vmem [shape: f32[36,4], index: 3, kind: input, shape index: {}]
  %s4 = inlined_call_operand.vmem [shape: f32[1,4], index: 4, kind: input, shape index: {}]
  %s5 = inlined_call_operand.vmem [shape: f32[2,16,16,4], index: 5, kind: output, shape index: {}]
  %s6 = sld [smem:[#allocation0]]
  $region53: #{residual_block_forward.1} parent=0
    _
  %s8 = ssub.s32 1, %s6
  %s9 = scalar_select 0, %s8, %s6
  loop: start=0, step=1, limit=4
  $region2: #{residual_block_forward.1} parent=0 // loop_pre_header
    _
  $region3: #{residual_block_forward.1} parent=0 // loop_header
    %s11 = sphi 0, %s15
    %p12 = scmp.ge.s32.totalorder %s11, 4
    %s21 = sphi 0, %s23
    %s24 = sphi 0, %s21
    %s25 = sphi 0, %s24
    %s41 = sphi 0, %s25
    %s45 = sphi 0, %s45
    %s47 = sphi 0, %s45
    %s48 = sphi 0, %s47
    %s62 = sphi 0, %s48
    %s66 = sphi 0, %s66
    %s68 = sphi 0, %s66
    %s69 = sphi 0, %s68
    %s83 = sphi 0, %s69
    %s87 = sphi 0, %s87
    %s89 = sphi 0, %s87
    %s90 = sphi 0, %s89
    %s104 = sphi 0, %s90
    %s108 = sphi 0, %s108
    %s110 = sphi 0, %s108
    %s111 = sphi 0, %s110
    %s125 = sphi 0, %s111
    %s131 = sphi 0, %s133
    %s134 = sphi 0, %s131
    %s135 = sphi 0, %s134
    %s151 = sphi 0, %s135
  $region4: #{residual_block_forward.1} parent=0 // loop_header_branch
    %14 = sbr.rel (%p12) target = $region8
  $region5: #{residual_block_forward.1} parent=0 // loop_body
    %s16 = ssub.s32 %s11, 1
    %s17 = ssub.s32 %s11, 2
    %s18 = sadd.s32 %s11, 1
    %s19 = ssub.s32 %s11, %s18
    %p20 = scmp.eq.s32.totalorder %s19, 0
    %s22 = sadd.s32 %s21, 1
    %s23 = scalar_select %p20, %s21, %s22
    %p26 = pneg %p20
    %p27 = scmp.eq.s32.totalorder %s11, 1
    %p28 = por %p26, %p27
    %p29 = scmp.ne.s32.totalorder %s21, %s24
    %p30 = scmp.eq.s32.totalorder %s11, 0
    %p31 = por %p29, %p30
    %p32 = scmp.ne.s32.totalorder %s21, %s24
    %p33 = scmp.eq.s32.totalorder %s16, 1
    %p34 = por %p32, %p33
    %p35 = scmp.ne.s32.totalorder %s24, %s25
    %p36 = scmp.eq.s32.totalorder %s16, 0
    %p37 = por %p35, %p36
    %p38 = scmp.ne.s32.totalorder %s24, %s25
    %p39 = scmp.eq.s32.totalorder %s17, 1
    %p40 = por %p38, %p39
    %p42 = scmp.ne.s32.totalorder %s25, %s41
    %p43 = scmp.eq.s32.totalorder %s17, 0
    %p44 = por %p42, %p43
    %s46 = sadd.s32 %s45, 1
    %p49 = scmp.eq.s32.totalorder %s11, 1
    %p50 = scmp.ne.s32.totalorder %s45, %s47
    %p51 = scmp.eq.s32.totalorder %s11, 0
    %p52 = por %p50, %p51
    %p53 = scmp.ne.s32.totalorder %s45, %s47
    %p54 = scmp.eq.s32.totalorder %s16, 1
    %p55 = por %p53, %p54
    %p56 = scmp.ne.s32.totalorder %s47, %s48
    %p57 = scmp.eq.s32.totalorder %s16, 0
    %p58 = por %p56, %p57
    %p59 = scmp.ne.s32.totalorder %s47, %s48
    %p60 = scmp.eq.s32.totalorder %s17, 1
    %p61 = por %p59, %p60
    %p63 = scmp.ne.s32.totalorder %s48, %s62
    %p64 = scmp.eq.s32.totalorder %s17, 0
    %p65 = por %p63, %p64
    %s67 = sadd.s32 %s66, 1
    %p70 = scmp.eq.s32.totalorder %s11, 1
    %p71 = scmp.ne.s32.totalorder %s66, %s68
    %p72 = scmp.eq.s32.totalorder %s11, 0
    %p73 = por %p71, %p72
    %p74 = scmp.ne.s32.totalorder %s66, %s68
    %p75 = scmp.eq.s32.totalorder %s16, 1
    %p76 = por %p74, %p75
    %p77 = scmp.ne.s32.totalorder %s68, %s69
    %p78 = scmp.eq.s32.totalorder %s16, 0
    %p79 = por %p77, %p78
    %p80 = scmp.ne.s32.totalorder %s68, %s69
    %p81 = scmp.eq.s32.totalorder %s17, 1
    %p82 = por %p80, %p81
    %p84 = scmp.ne.s32.totalorder %s69, %s83
    %p85 = scmp.eq.s32.totalorder %s17, 0
    %p86 = por %p84, %p85
    %s88 = sadd.s32 %s87, 1
    %p91 = scmp.eq.s32.totalorder %s11, 1
    %p92 = scmp.ne.s32.totalorder %s87, %s89
    %p93 = scmp.eq.s32.totalorder %s11, 0
    %p94 = por %p92, %p93
    %p95 = scmp.ne.s32.totalorder %s87, %s89
    %p96 = scmp.eq.s32.totalorder %s16, 1
    %p97 = por %p95, %p96
    %p98 = scmp.ne.s32.totalorder %s89, %s90
    %p99 = scmp.eq.s32.totalorder %s16, 0
    %p100 = por %p98, %p99
    %p101 = scmp.ne.s32.totalorder %s89, %s90
    %p102 = scmp.eq.s32.totalorder %s17, 1
    %p103 = por %p101, %p102
    %p105 = scmp.ne.s32.totalorder %s90, %s104
    %p106 = scmp.eq.s32.totalorder %s17, 0
    %p107 = por %p105, %p106
    %s109 = sadd.s32 %s108, 1
    %p112 = scmp.eq.s32.totalorder %s11, 1
    %p113 = scmp.ne.s32.totalorder %s108, %s110
    %p114 = scmp.eq.s32.totalorder %s11, 0
    %p115 = por %p113, %p114
    %p116 = scmp.ne.s32.totalorder %s108, %s110
    %p117 = scmp.eq.s32.totalorder %s16, 1
    %p118 = por %p116, %p117
    %p119 = scmp.ne.s32.totalorder %s110, %s111
    %p120 = scmp.eq.s32.totalorder %s16, 0
    %p121 = por %p119, %p120
    %p122 = scmp.ne.s32.totalorder %s110, %s111
    %p123 = scmp.eq.s32.totalorder %s17, 1
    %p124 = por %p122, %p123
    %p126 = scmp.ne.s32.totalorder %s111, %s125
    %p127 = scmp.eq.s32.totalorder %s17, 0
    %p128 = por %p126, %p127
    %s129 = ssub.s32 %s11, %s18
    %p130 = scmp.eq.s32.totalorder %s129, 0
    %s132 = sadd.s32 %s131, 1
    %s133 = scalar_select %p130, %s131, %s132
    %p136 = pneg %p130
    %p137 = scmp.eq.s32.totalorder %s11, 1
    %p138 = por %p136, %p137
    %p139 = scmp.ne.s32.totalorder %s131, %s134
    %p140 = scmp.eq.s32.totalorder %s11, 0
    %p141 = por %p139, %p140
    %p142 = scmp.ne.s32.totalorder %s131, %s134
    %p143 = scmp.eq.s32.totalorder %s16, 1
    %p144 = por %p142, %p143
    %p145 = scmp.ne.s32.totalorder %s134, %s135
    %p146 = scmp.eq.s32.totalorder %s16, 0
    %p147 = por %p145, %p146
    %p148 = scmp.ne.s32.totalorder %s134, %s135
    %p149 = scmp.eq.s32.totalorder %s17, 1
    %p150 = por %p148, %p149
    %p152 = scmp.ne.s32.totalorder %s135, %s151
    %p153 = scmp.eq.s32.totalorder %s17, 0
    %p154 = por %p152, %p153
    %p155 = scmp.le.s32.totalorder 1, %s11
    %p156 = scmp.lt.s32.totalorder %s11, 3
    %p157 = pnand %p155, %p156
    %p158 = pneg %p157
    // Predicated region
    $region9: #{residual_block_forward.1} parent=5 // pred_check
      _
    $region10: #{residual_block_forward.1} parent=5 // pred_check_branch
      %160 = sbr.rel (%p157) target = $region12
    $region11: #{residual_block_forward.1} parent=5 // pred_region
      %s161 = ssub.s32 %s11, 1
      // Predicated region
      $region13: #{residual_block_forward.1} parent=11 // pred_check
        %p162 = pneg %p58
      $region14: #{residual_block_forward.1} parent=11 // pred_check_branch
        %164 = sbr.rel (%p162) target = $region16
      $region15: #{residual_block_forward.1} parent=11 // pred_region
        _
      $region16: #{residual_block_forward.1} parent=11 // pred_fallthru
        _
      // Predicated region
      $region17: #{residual_block_forward.1} parent=11 // pred_check
        %p165 = pneg %p79
      $region18: #{residual_block_forward.1} parent=11 // pred_check_branch
        %167 = sbr.rel (%p165) target = $region20
      $region19: #{residual_block_forward.1} parent=11 // pred_region
        _
      $region20: #{residual_block_forward.1} parent=11 // pred_fallthru
        _
      // Predicated region
      $region21: #{residual_block_forward.1} parent=11 // pred_check
        %p168 = pneg %p100
      $region22: #{residual_block_forward.1} parent=11 // pred_check_branch
        %170 = sbr.rel (%p168) target = $region24
      $region23: #{residual_block_forward.1} parent=11 // pred_region
        _
      $region24: #{residual_block_forward.1} parent=11 // pred_fallthru
        _
      // Predicated region
      $region25: #{residual_block_forward.1} parent=11 // pred_check
        %p171 = pneg %p121
      $region26: #{residual_block_forward.1} parent=11 // pred_check_branch
        %173 = sbr.rel (%p171) target = $region28
      $region27: #{residual_block_forward.1} parent=11 // pred_region
        _
      $region28: #{residual_block_forward.1} parent=11 // pred_fallthru
        _
    $region12: #{residual_block_forward.1} parent=5 // pred_fallthru
      _
    %p174 = scmp.lt.s32.totalorder %s11, 2
    // Predicated region
    $region29: #{residual_block_forward.1} parent=5 // pred_check
      %p175 = pneg %p174
    $region30: #{residual_block_forward.1} parent=5 // pred_check_branch
      %177 = sbr.rel (%p175) target = $region32
    $region31: #{residual_block_forward.1} parent=5 // pred_region
      // Predicated region
      $region33: #{residual_block_forward.1} parent=31 // pred_check
        %p178 = pneg %p31
      $region34: #{residual_block_forward.1} parent=31 // pred_check_branch
        %180 = sbr.rel (%p178) target = $region36
      $region35: #{residual_block_forward.1} parent=31 // pred_region
        %p181 = scmp.lt.s32.totalorder %s11, 1
        %s182 = scalar_select %p181, %s11, 1
        %s183 = smul.addr %s182, 32
        %s184 = smul.addr %s183, 8
        %s185 = scalar_lea.vmem %s0, %s184
      $region36: #{residual_block_forward.1} parent=31 // pred_fallthru
        _
    $region32: #{residual_block_forward.1} parent=5 // pred_fallthru
      _
    %p186 = scmp.le.s32.totalorder 1, %s11
    %p187 = scmp.lt.s32.totalorder %s11, 3
    %p188 = pnand %p186, %p187
    %p189 = pneg %p188
    // Predicated region
    $region37: #{residual_block_forward.1} parent=5 // pred_check
      _
    $region38: #{residual_block_forward.1} parent=5 // pred_check_branch
      %191 = sbr.rel (%p188) target = $region40
    $region39: #{residual_block_forward.1} parent=5 // pred_region
      %s192 = ssub.s32 %s11, 1
      %p193 = scmp.lt.s32.totalorder %s16, 1
      %s194 = scalar_select %p193, %s16, 1
      %s195 = smul.addr %s194, 32
      %s196 = smul.addr %s195, 8
      %s197 = scalar_lea.vmem %s0, %s196
      %p198 = pneg %p37
      %p199 = pneg %p34
      %p200 = pneg %p58
      %p201 = pneg %p55
      %p202 = pneg %p79
      %p203 = pneg %p76
      %p204 = pneg %p100
      %p205 = pneg %p97
      %p206 = pneg %p121
      %p207 = pneg %p118
      %p208 = pneg %p147
      %p209 = pneg %p144
      %p210 = scmp.lt.s32.totalorder %s16, 1
      %s211 = scalar_select %p210, %s16, 1
      %s212 = smul.addr %s211, 32
      %s213 = smul.addr %s212, 8
      %s214 = scalar_lea.vmem %s5, %s213
      %p215 = scmp.lt.s32.totalorder %s16, 1
      %s216 = scalar_select %p215, %s16, 1
      %s217 = smul.addr %s216, 32
      %s218 = smul.addr %s217, 8
      %s219 = scalar_lea.vmem %s0, %s218
      %p220 = scmp.lt.s32.totalorder %s16, 1
      %s221 = scalar_select %p220, %s16, 1
      %s222 = smul.addr %s221, 32
      %s223 = smul.addr %s222, 8
      %s224 = scalar_lea.vmem %s5, %s223
      %v225 = vld [vmem:[%s219] sm:$0xff]
      %v226 = vld [vmem:[%s219 + $0x8] sm:$0xff]
      %v227 = vld [vmem:[%s219 + $0x10] sm:$0xff]
      %v228 = vld [vmem:[%s219 + $0x18] sm:$0xff]
      %v229 = vld [vmem:[%s219 + $0x20] sm:$0xff]
      %v230 = vld [vmem:[%s219 + $0x28] sm:$0xff]
      %v231 = vld [vmem:[%s219 + $0x30] sm:$0xff]
      %v232 = vld [vmem:[%s219 + $0x38] sm:$0xff]
      %v233 = vld [vmem:[%s219 + $0x40] sm:$0xff]
      %v234 = vld [vmem:[%s219 + $0x48] sm:$0xff]
      %v235 = vld [vmem:[%s219 + $0x50] sm:$0xff]
      %v236 = vld [vmem:[%s219 + $0x58] sm:$0xff]
      %v237 = vld [vmem:[%s219 + $0x60] sm:$0xff]
      %v238 = vld [vmem:[%s219 + $0x68] sm:$0xff]
      %v239 = vld [vmem:[%s219 + $0x70] sm:$0xff]
      %v240 = vld [vmem:[%s219 + $0x78] sm:$0xff]
      %v241 = vld [vmem:[%s219 + $0x80] sm:$0xff]
      %v242 = vld [vmem:[%s219 + $0x88] sm:$0xff]
      %v243 = vld [vmem:[%s219 + $0x90] sm:$0xff]
      %v244 = vld [vmem:[%s219 + $0x98] sm:$0xff]
      %v245 = vld [vmem:[%s219 + $0xa0] sm:$0xff]
      %v246 = vld [vmem:[%s219 + $0xa8] sm:$0xff]
      %v247 = vld [vmem:[%s219 + $0xb0] sm:$0xff]
      %v248 = vld [vmem:[%s219 + $0xb8] sm:$0xff]
      %v249 = vld [vmem:[%s219 + $0xc0] sm:$0xff]
      %v250 = vld [vmem:[%s219 + $0xc8] sm:$0xff]
      %v251 = vld [vmem:[%s219 + $0xd0] sm:$0xff]
      %v252 = vld [vmem:[%s219 + $0xd8] sm:$0xff]
      %v253 = vld [vmem:[%s219 + $0xe0] sm:$0xff]
      %v254 = vld [vmem:[%s219 + $0xe8] sm:$0xff]
      %v255 = vld [vmem:[%s219 + $0xf0] sm:$0xff]
      %v256 = vld [vmem:[%s219 + $0xf8] sm:$0xff]
      %v257 = vld [vmem:[%s1] sm:$0xff]
      %v258 = vld [vmem:[%s1 + $0x8] sm:$0xff]
      %v259 = vld [vmem:[%s1 + $0x10] sm:$0xff]
      %v260 = vld [vmem:[%s1 + $0x18] sm:$0xff]
      %v261 = vld [vmem:[%s1 + $0x20] sm:$0xf]
      %v262 = vld [vmem:[%s2] sm:$0x1]
      %v279 = vrot.slane %v227, 1
      %v280 = vrot.slane %v225, 1
      %v281 = vrot.slane %v229, 1
      %v282 = vrot.slane %v231, 1
      %v283 = vrot.slane %v233, 1
      %v284 = vrot.slane %v235, 1
      %v285 = vrot.slane %v237, 1
      %v286 = vrot.slane %v239, 1
      %v287 = vrot.slane %v241, 1
      %v288 = vrot.slane %v243, 1
      %v289 = vrot.slane %v245, 1
      %v290 = vrot.slane %v247, 1
      %v291 = vrot.slane %v249, 1
      %v292 = vrot.slane %v251, 1
      %v293 = vrot.slane %v253, 1
      %v294 = vrot.slane %v255, 1
      %vm327 = vcmask 1040384
      %v328 = vrot.slane %v227, 7
      %v329 = vrot.slane %v228, 7
      %v330 = vsel %vm327, %v328, %v329
      %v331 = vrot.slane %v225, 7
      %v332 = vrot.slane %v226, 7
      %v333 = vsel %vm327, %v331, %v332
      %v334 = vrot.slane %v229, 7
      %v335 = vrot.slane %v230, 7
      %v336 = vsel %vm327, %v334, %v335
      %v337 = vrot.slane %v231, 7
      %v338 = vrot.slane %v232, 7
      %v339 = vsel %vm327, %v337, %v338
      %v340 = vrot.slane %v233, 7
      %v341 = vrot.slane %v234, 7
      %v342 = vsel %vm327, %v340, %v341
      %v343 = vrot.slane %v235, 7
      %v344 = vrot.slane %v236, 7
      %v345 = vsel %vm327, %v343, %v344
      %v346 = vrot.slane %v237, 7
      %v347 = vrot.slane %v238, 7
      %v348 = vsel %vm327, %v346, %v347
      %v349 = vrot.slane %v239, 7
      %v350 = vrot.slane %v240, 7
      %v351 = vsel %vm327, %v349, %v350
      %v352 = vrot.slane %v241, 7
      %v353 = vrot.slane %v242, 7
      %v354 = vsel %vm327, %v352, %v353
      %v355 = vrot.slane %v243, 7
      %v356 = vrot.slane %v244, 7
      %v357 = vsel %vm327, %v355, %v356
      %v358 = vrot.slane %v245, 7
      %v359 = vrot.slane %v246, 7
      %v360 = vsel %vm327, %v358, %v359
      %v361 = vrot.slane %v247, 7
      %v362 = vrot.slane %v248, 7
      %v363 = vsel %vm327, %v361, %v362
      %v364 = vrot.slane %v249, 7
      %v365 = vrot.slane %v250, 7
      %v366 = vsel %vm327, %v364, %v365
      %v367 = vrot.slane %v251, 7
      %v368 = vrot.slane %v252, 7
      %v369 = vsel %vm327, %v367, %v368
      %v370 = vrot.slane %v253, 7
      %v371 = vrot.slane %v254, 7
      %v372 = vsel %vm327, %v370, %v371
      %v373 = vrot.slane %v255, 7
      %v374 = vrot.slane %v256, 7
      %v375 = vsel %vm327, %v373, %v374
      %v423 = vrot.slane %v228, 5
      %v424 = vrot.slane %v226, 5
      %v425 = vrot.slane %v230, 5
      %v426 = vrot.slane %v232, 5
      %v427 = vrot.slane %v234, 5
      %v428 = vrot.slane %v236, 5
      %v429 = vrot.slane %v238, 5
      %v430 = vrot.slane %v240, 5
      %v431 = vrot.slane %v242, 5
      %v432 = vrot.slane %v244, 5
      %v433 = vrot.slane %v246, 5
      %v434 = vrot.slane %v248, 5
      %v435 = vrot.slane %v250, 5
      %v436 = vrot.slane %v252, 5
      %v437 = vrot.slane %v254, 5
      %v438 = vrot.slane %v256, 5
      %v455 = vsel %vm327, %v279, %v328
      %v456 = vsel %vm327, %v280, %v331
      %v457 = vsel %vm327, %v281, %v334
      %v458 = vsel %vm327, %v282, %v337
      %v459 = vsel %vm327, %v283, %v340
      %v460 = vsel %vm327, %v284, %v343
      %v461 = vsel %vm327, %v285, %v346
      %v462 = vsel %vm327, %v286, %v349
      %v463 = vsel %vm327, %v287, %v352
      %v464 = vsel %vm327, %v288, %v355
      %v465 = vsel %vm327, %v289, %v358
      %v466 = vsel %vm327, %v290, %v361
      %v467 = vsel %vm327, %v291, %v364
      %v468 = vsel %vm327, %v292, %v367
      %v469 = vsel %vm327, %v293, %v370
      %v470 = vsel %vm327, %v294, %v373
      %v471 = vsel %vm327, %v329, %v423
      %v472 = vsel %vm327, %v332, %v424
      %v473 = vsel %vm327, %v335, %v425
      %v474 = vsel %vm327, %v338, %v426
      %v475 = vsel %vm327, %v341, %v427
      %v476 = vsel %vm327, %v344, %v428
      %v477 = vsel %vm327, %v347, %v429
      %v478 = vsel %vm327, %v350, %v430
      %v479 = vsel %vm327, %v353, %v431
      %v480 = vsel %vm327, %v356, %v432
      %v481 = vsel %vm327, %v359, %v433
      %v482 = vsel %vm327, %v362, %v434
      %v483 = vsel %vm327, %v365, %v435
      %v484 = vsel %vm327, %v368, %v436
      %v485 = vsel %vm327, %v371, %v437
      %v486 = vsel %vm327, %v374, %v438
      %vm517 = vcmask 1046528
      %v518 = vrot.slane %v455, 1
      %v519 = vrot.slane %v330, 1
      %v520 = vsel %vm517, %v518, %v519
      %v521 = vrot.slane %v471, 1
      %v522 = vsel %vm517, %v519, %v521
      %v523 = vrot.slane %v456, 1
      %v524 = vrot.slane %v333, 1
      %v525 = vsel %vm517, %v523, %v524
      %v526 = vrot.slane %v472, 1
      %v527 = vsel %vm517, %v524, %v526
      %v528 = vrot.slane %v457, 1
      %v529 = vrot.slane %v336, 1
      %v530 = vsel %vm517, %v528, %v529
      %v531 = vrot.slane %v473, 1
      %v532 = vsel %vm517, %v529, %v531
      %v533 = vrot.slane %v458, 1
      %v534 = vrot.slane %v339, 1
      %v535 = vsel %vm517, %v533, %v534
      %v536 = vrot.slane %v474, 1
      %v537 = vsel %vm517, %v534, %v536
      %v538 = vrot.slane %v459, 1
      %v539 = vrot.slane %v342, 1
      %v540 = vsel %vm517, %v538, %v539
      %v541 = vrot.slane %v475, 1
      %v542 = vsel %vm517, %v539, %v541
      %v543 = vrot.slane %v460, 1
      %v544 = vrot.slane %v345, 1
      %v545 = vsel %vm517, %v543, %v544
      %v546 = vrot.slane %v476, 1
      %v547 = vsel %vm517, %v544, %v546
      %v548 = vrot.slane %v461, 1
      %v549 = vrot.slane %v348, 1
      %v550 = vsel %vm517, %v548, %v549
      %v551 = vrot.slane %v477, 1
      %v552 = vsel %vm517, %v549, %v551
      %v553 = vrot.slane %v462, 1
      %v554 = vrot.slane %v351, 1
      %v555 = vsel %vm517, %v553, %v554
      %v556 = vrot.slane %v478, 1
      %v557 = vsel %vm517, %v554, %v556
      %v558 = vrot.slane %v463, 1
      %v559 = vrot.slane %v354, 1
      %v560 = vsel %vm517, %v558, %v559
      %v561 = vrot.slane %v479, 1
      %v562 = vsel %vm517, %v559, %v561
      %v563 = vrot.slane %v464, 1
      %v564 = vrot.slane %v357, 1
      %v565 = vsel %vm517, %v563, %v564
      %v566 = vrot.slane %v480, 1
      %v567 = vsel %vm517, %v564, %v566
      %v568 = vrot.slane %v465, 1
      %v569 = vrot.slane %v360, 1
      %v570 = vsel %vm517, %v568, %v569
      %v571 = vrot.slane %v481, 1
      %v572 = vsel %vm517, %v569, %v571
      %v573 = vrot.slane %v466, 1
      %v574 = vrot.slane %v363, 1
      %v575 = vsel %vm517, %v573, %v574
      %v576 = vrot.slane %v482, 1
      %v577 = vsel %vm517, %v574, %v576
      %v578 = vrot.slane %v467, 1
      %v579 = vrot.slane %v366, 1
      %v580 = vsel %vm517, %v578, %v579
      %v581 = vrot.slane %v483, 1
      %v582 = vsel %vm517, %v579, %v581
      %v583 = vrot.slane %v468, 1
      %v584 = vrot.slane %v369, 1
      %v585 = vsel %vm517, %v583, %v584
      %v586 = vrot.slane %v484, 1
      %v587 = vsel %vm517, %v584, %v586
      %v588 = vrot.slane %v469, 1
      %v589 = vrot.slane %v372, 1
      %v590 = vsel %vm517, %v588, %v589
      %v591 = vrot.slane %v485, 1
      %v592 = vsel %vm517, %v589, %v591
      %593 = vrot.lane.b32.xlu0 %v520, 4
      %v594 = vpop.permute.xlu0 %593
      %595 = vrot.lane.b32.xlu0 %v522, 4
      %v596 = vpop.permute.xlu0 %595
      %597 = vrot.lane.b32.xlu0 %v525, 4
      %v598 = vpop.permute.xlu0 %597
      %599 = vrot.lane.b32.xlu0 %v527, 4
      %v600 = vpop.permute.xlu0 %599
      %601 = vrot.lane.b32.xlu0 %v530, 4
      %v602 = vpop.permute.xlu0 %601
      %603 = vrot.lane.b32.xlu0 %v532, 4
      %v604 = vpop.permute.xlu0 %603
      %605 = vrot.lane.b32.xlu0 %v535, 4
      %v606 = vpop.permute.xlu0 %605
      %607 = vrot.lane.b32.xlu0 %v537, 4
      %v608 = vpop.permute.xlu0 %607
      %609 = vrot.lane.b32.xlu0 %v540, 4
      %v610 = vpop.permute.xlu0 %609
      %611 = vrot.lane.b32.xlu0 %v542, 4
      %v612 = vpop.permute.xlu0 %611
      %613 = vrot.lane.b32.xlu0 %v545, 4
      %v614 = vpop.permute.xlu0 %613
      %615 = vrot.lane.b32.xlu0 %v547, 4
      %v616 = vpop.permute.xlu0 %615
      %617 = vrot.lane.b32.xlu0 %v550, 4
      %v618 = vpop.permute.xlu0 %617
      %619 = vrot.lane.b32.xlu0 %v552, 4
      %v620 = vpop.permute.xlu0 %619
      %621 = vrot.lane.b32.xlu0 %v555, 4
      %v622 = vpop.permute.xlu0 %621
      %623 = vrot.lane.b32.xlu0 %v557, 4
      %v624 = vpop.permute.xlu0 %623
      %625 = vrot.lane.b32.xlu0 %v560, 4
      %v626 = vpop.permute.xlu0 %625
      %627 = vrot.lane.b32.xlu0 %v562, 4
      %v628 = vpop.permute.xlu0 %627
      %629 = vrot.lane.b32.xlu0 %v565, 4
      %v630 = vpop.permute.xlu0 %629
      %631 = vrot.lane.b32.xlu0 %v567, 4
      %v632 = vpop.permute.xlu0 %631
      %633 = vrot.lane.b32.xlu0 %v570, 4
      %v634 = vpop.permute.xlu0 %633
      %635 = vrot.lane.b32.xlu0 %v572, 4
      %v636 = vpop.permute.xlu0 %635
      %637 = vrot.lane.b32.xlu0 %v575, 4
      %v638 = vpop.permute.xlu0 %637
      %639 = vrot.lane.b32.xlu0 %v577, 4
      %v640 = vpop.permute.xlu0 %639
      %641 = vrot.lane.b32.xlu0 %v580, 4
      %v642 = vpop.permute.xlu0 %641
      %643 = vrot.lane.b32.xlu0 %v582, 4
      %v644 = vpop.permute.xlu0 %643
      %645 = vrot.lane.b32.xlu0 %v585, 4
      %v646 = vpop.permute.xlu0 %645
      %647 = vrot.lane.b32.xlu0 %v587, 4
      %v648 = vpop.permute.xlu0 %647
      %649 = vrot.lane.b32.xlu0 %v590, 4
      %v650 = vpop.permute.xlu0 %649
      %651 = vrot.lane.b32.xlu0 %v592, 4
      %v652 = vpop.permute.xlu0 %651
      %vm683 = vcmask 1045504
      %v684 = vrot.slane %v455, 2
      %v685 = vrot.slane %v330, 2
      %v686 = vsel %vm683, %v684, %v685
      %v687 = vrot.slane %v471, 2
      %v688 = vsel %vm683, %v685, %v687
      %v689 = vrot.slane %v456, 2
      %v690 = vrot.slane %v333, 2
      %v691 = vsel %vm683, %v689, %v690
      %v692 = vrot.slane %v472, 2
      %v693 = vsel %vm683, %v690, %v692
      %v694 = vrot.slane %v457, 2
      %v695 = vrot.slane %v336, 2
      %v696 = vsel %vm683, %v694, %v695
      %v697 = vrot.slane %v473, 2
      %v698 = vsel %vm683, %v695, %v697
      %v699 = vrot.slane %v458, 2
      %v700 = vrot.slane %v339, 2
      %v701 = vsel %vm683, %v699, %v700
      %v702 = vrot.slane %v474, 2
      %v703 = vsel %vm683, %v700, %v702
      %v704 = vrot.slane %v459, 2
      %v705 = vrot.slane %v342, 2
      %v706 = vsel %vm683, %v704, %v705
      %v707 = vrot.slane %v475, 2
      %v708 = vsel %vm683, %v705, %v707
      %v709 = vrot.slane %v460, 2
      %v710 = vrot.slane %v345, 2
      %v711 = vsel %vm683, %v709, %v710
      %v712 = vrot.slane %v476, 2
      %v713 = vsel %vm683, %v710, %v712
      %v714 = vrot.slane %v461, 2
      %v715 = vrot.slane %v348, 2
      %v716 = vsel %vm683, %v714, %v715
      %v717 = vrot.slane %v477, 2
      %v718 = vsel %vm683, %v715, %v717
      %v719 = vrot.slane %v462, 2
      %v720 = vrot.slane %v351, 2
      %v721 = vsel %vm683, %v719, %v720
      %v722 = vrot.slane %v478, 2
      %v723 = vsel %vm683, %v720, %v722
      %v724 = vrot.slane %v463, 2
      %v725 = vrot.slane %v354, 2
      %v726 = vsel %vm683, %v724, %v725
      %v727 = vrot.slane %v479, 2
      %v728 = vsel %vm683, %v725, %v727
      %v729 = vrot.slane %v464, 2
      %v730 = vrot.slane %v357, 2
      %v731 = vsel %vm683, %v729, %v730
      %v732 = vrot.slane %v480, 2
      %v733 = vsel %vm683, %v730, %v732
      %v734 = vrot.slane %v465, 2
      %v735 = vrot.slane %v360, 2
      %v736 = vsel %vm683, %v734, %v735
      %v737 = vrot.slane %v481, 2
      %v738 = vsel %vm683, %v735, %v737
      %v739 = vrot.slane %v466, 2
      %v740 = vrot.slane %v363, 2
      %v741 = vsel %vm683, %v739, %v740
      %v742 = vrot.slane %v482, 2
      %v743 = vsel %vm683, %v740, %v742
      %v744 = vrot.slane %v467, 2
      %v745 = vrot.slane %v366, 2
      %v746 = vsel %vm683, %v744, %v745
      %v747 = vrot.slane %v483, 2
      %v748 = vsel %vm683, %v745, %v747
      %v749 = vrot.slane %v468, 2
      %v750 = vrot.slane %v369, 2
      %v751 = vsel %vm683, %v749, %v750
      %v752 = vrot.slane %v484, 2
      %v753 = vsel %vm683, %v750, %v752
      %v754 = vrot.slane %v469, 2
      %v755 = vrot.slane %v372, 2
      %v756 = vsel %vm683, %v754, %v755
      %v757 = vrot.slane %v485, 2
      %v758 = vsel %vm683, %v755, %v757
      %759 = vrot.lane.b32.xlu0 %v686, 8
      %v760 = vpop.permute.xlu0 %759
      %761 = vrot.lane.b32.xlu0 %v688, 8
      %v762 = vpop.permute.xlu0 %761
      %763 = vrot.lane.b32.xlu0 %v691, 8
      %v764 = vpop.permute.xlu0 %763
      %765 = vrot.lane.b32.xlu0 %v693, 8
      %v766 = vpop.permute.xlu0 %765
      %767 = vrot.lane.b32.xlu0 %v696, 8
      %v768 = vpop.permute.xlu0 %767
      %769 = vrot.lane.b32.xlu0 %v698, 8
      %v770 = vpop.permute.xlu0 %769
      %771 = vrot.lane.b32.xlu0 %v701, 8
      %v772 = vpop.permute.xlu0 %771
      %773 = vrot.lane.b32.xlu0 %v703, 8
      %v774 = vpop.permute.xlu0 %773
      %775 = vrot.lane.b32.xlu0 %v706, 8
      %v776 = vpop.permute.xlu0 %775
      %777 = vrot.lane.b32.xlu0 %v708, 8
      %v778 = vpop.permute.xlu0 %777
      %779 = vrot.lane.b32.xlu0 %v711, 8
      %v780 = vpop.permute.xlu0 %779
      %781 = vrot.lane.b32.xlu0 %v713, 8
      %v782 = vpop.permute.xlu0 %781
      %783 = vrot.lane.b32.xlu0 %v716, 8
      %v784 = vpop.permute.xlu0 %783
      %785 = vrot.lane.b32.xlu0 %v718, 8
      %v786 = vpop.permute.xlu0 %785
      %787 = vrot.lane.b32.xlu0 %v721, 8
      %v788 = vpop.permute.xlu0 %787
      %789 = vrot.lane.b32.xlu0 %v723, 8
      %v790 = vpop.permute.xlu0 %789
      %791 = vrot.lane.b32.xlu0 %v726, 8
      %v792 = vpop.permute.xlu0 %791
      %793 = vrot.lane.b32.xlu0 %v728, 8
      %v794 = vpop.permute.xlu0 %793
      %795 = vrot.lane.b32.xlu0 %v731, 8
      %v796 = vpop.permute.xlu0 %795
      %797 = vrot.lane.b32.xlu0 %v733, 8
      %v798 = vpop.permute.xlu0 %797
      %799 = vrot.lane.b32.xlu0 %v736, 8
      %v800 = vpop.permute.xlu0 %799
      %801 = vrot.lane.b32.xlu0 %v738, 8
      %v802 = vpop.permute.xlu0 %801
      %803 = vrot.lane.b32.xlu0 %v741, 8
      %v804 = vpop.permute.xlu0 %803
      %805 = vrot.lane.b32.xlu0 %v743, 8
      %v806 = vpop.permute.xlu0 %805
      %807 = vrot.lane.b32.xlu0 %v746, 8
      %v808 = vpop.permute.xlu0 %807
      %809 = vrot.lane.b32.xlu0 %v748, 8
      %v810 = vpop.permute.xlu0 %809
      %811 = vrot.lane.b32.xlu0 %v751, 8
      %v812 = vpop.permute.xlu0 %811
      %813 = vrot.lane.b32.xlu0 %v753, 8
      %v814 = vpop.permute.xlu0 %813
      %815 = vrot.lane.b32.xlu0 %v756, 8
      %v816 = vpop.permute.xlu0 %815
      %817 = vrot.lane.b32.xlu0 %v758, 8
      %v818 = vpop.permute.xlu0 %817
      %850 = vrot.lane.b32.xlu0 %v456, 12
      %v851 = vpop.permute.xlu0 %850
      %852 = vrot.lane.b32.xlu0 %v333, 12
      %v853 = vpop.permute.xlu0 %852
      %854 = vrot.lane.b32.xlu0 %v455, 12
      %v855 = vpop.permute.xlu0 %854
      %856 = vrot.lane.b32.xlu0 %v330, 12
      %v857 = vpop.permute.xlu0 %856
      %858 = vrot.lane.b32.xlu0 %v457, 12
      %v859 = vpop.permute.xlu0 %858
      %860 = vrot.lane.b32.xlu0 %v336, 12
      %v861 = vpop.permute.xlu0 %860
      %862 = vrot.lane.b32.xlu0 %v458, 12
      %v863 = vpop.permute.xlu0 %862
      %864 = vrot.lane.b32.xlu0 %v339, 12
      %v865 = vpop.permute.xlu0 %864
      %866 = vrot.lane.b32.xlu0 %v459, 12
      %v867 = vpop.permute.xlu0 %866
      %868 = vrot.lane.b32.xlu0 %v342, 12
      %v869 = vpop.permute.xlu0 %868
      %870 = vrot.lane.b32.xlu0 %v460, 12
      %v871 = vpop.permute.xlu0 %870
      %872 = vrot.lane.b32.xlu0 %v345, 12
      %v873 = vpop.permute.xlu0 %872
      %874 = vrot.lane.b32.xlu0 %v461, 12
      %v875 = vpop.permute.xlu0 %874
      %876 = vrot.lane.b32.xlu0 %v348, 12
      %v877 = vpop.permute.xlu0 %876
      %878 = vrot.lane.b32.xlu0 %v462, 12
      %v879 = vpop.permute.xlu0 %878
      %880 = vrot.lane.b32.xlu0 %v351, 12
      %v881 = vpop.permute.xlu0 %880
      %882 = vrot.lane.b32.xlu0 %v463, 12
      %v883 = vpop.permute.xlu0 %882
      %884 = vrot.lane.b32.xlu0 %v354, 12
      %v885 = vpop.permute.xlu0 %884
      %886 = vrot.lane.b32.xlu0 %v464, 12
      %v887 = vpop.permute.xlu0 %886
      %888 = vrot.lane.b32.xlu0 %v357, 12
      %v889 = vpop.permute.xlu0 %888
      %890 = vrot.lane.b32.xlu0 %v465, 12
      %v891 = vpop.permute.xlu0 %890
      %892 = vrot.lane.b32.xlu0 %v360, 12
      %v893 = vpop.permute.xlu0 %892
      %894 = vrot.lane.b32.xlu0 %v466, 12
      %v895 = vpop.permute.xlu0 %894
      %896 = vrot.lane.b32.xlu0 %v363, 12
      %v897 = vpop.permute.xlu0 %896
      %898 = vrot.lane.b32.xlu0 %v467, 12
      %v899 = vpop.permute.xlu0 %898
      %900 = vrot.lane.b32.xlu0 %v366, 12
      %v901 = vpop.permute.xlu0 %900
      %902 = vrot.lane.b32.xlu0 %v468, 12
      %v903 = vpop.permute.xlu0 %902
      %904 = vrot.lane.b32.xlu0 %v369, 12
      %v905 = vpop.permute.xlu0 %904
      %906 = vrot.lane.b32.xlu0 %v469, 12
      %v907 = vpop.permute.xlu0 %906
      %908 = vrot.lane.b32.xlu0 %v372, 12
      %v909 = vpop.permute.xlu0 %908
      %910 = vrot.lane.b32.xlu0 %v470, 12
      %v911 = vpop.permute.xlu0 %910
      %912 = vrot.lane.b32.xlu0 %v375, 12
      %v913 = vpop.permute.xlu0 %912
      %v947 = vrot.slane %v470, 1
      %v948 = vrot.slane %v375, 1
      %v949 = vsel %vm517, %v947, %v948
      %v950 = vrot.slane %v486, 1
      %v951 = vsel %vm517, %v948, %v950
      %952 = vrot.lane.b32.xlu0 %v525, 16
      %v953 = vpop.permute.xlu0 %952
      %954 = vrot.lane.b32.xlu0 %v527, 16
      %v955 = vpop.permute.xlu0 %954
      %956 = vrot.lane.b32.xlu0 %v520, 16
      %v957 = vpop.permute.xlu0 %956
      %958 = vrot.lane.b32.xlu0 %v522, 16
      %v959 = vpop.permute.xlu0 %958
      %960 = vrot.lane.b32.xlu0 %v530, 16
      %v961 = vpop.permute.xlu0 %960
      %962 = vrot.lane.b32.xlu0 %v532, 16
      %v963 = vpop.permute.xlu0 %962
      %964 = vrot.lane.b32.xlu0 %v535, 16
      %v965 = vpop.permute.xlu0 %964
      %966 = vrot.lane.b32.xlu0 %v537, 16
      %v967 = vpop.permute.xlu0 %966
      %968 = vrot.lane.b32.xlu0 %v540, 16
      %v969 = vpop.permute.xlu0 %968
      %970 = vrot.lane.b32.xlu0 %v542, 16
      %v971 = vpop.permute.xlu0 %970
      %972 = vrot.lane.b32.xlu0 %v545, 16
      %v973 = vpop.permute.xlu0 %972
      %974 = vrot.lane.b32.xlu0 %v547, 16
      %v975 = vpop.permute.xlu0 %974
      %976 = vrot.lane.b32.xlu0 %v550, 16
      %v977 = vpop.permute.xlu0 %976
      %978 = vrot.lane.b32.xlu0 %v552, 16
      %v979 = vpop.permute.xlu0 %978
      %980 = vrot.lane.b32.xlu0 %v555, 16
      %v981 = vpop.permute.xlu0 %980
      %982 = vrot.lane.b32.xlu0 %v557, 16
      %v983 = vpop.permute.xlu0 %982
      %984 = vrot.lane.b32.xlu0 %v560, 16
      %v985 = vpop.permute.xlu0 %984
      %986 = vrot.lane.b32.xlu0 %v562, 16
      %v987 = vpop.permute.xlu0 %986
      %988 = vrot.lane.b32.xlu0 %v565, 16
      %v989 = vpop.permute.xlu0 %988
      %990 = vrot.lane.b32.xlu0 %v567, 16
      %v991 = vpop.permute.xlu0 %990
      %992 = vrot.lane.b32.xlu0 %v570, 16
      %v993 = vpop.permute.xlu0 %992
      %994 = vrot.lane.b32.xlu0 %v572, 16
      %v995 = vpop.permute.xlu0 %994
      %996 = vrot.lane.b32.xlu0 %v575, 16
      %v997 = vpop.permute.xlu0 %996
      %998 = vrot.lane.b32.xlu0 %v577, 16
      %v999 = vpop.permute.xlu0 %998
      %1000 = vrot.lane.b32.xlu0 %v580, 16
      %v1001 = vpop.permute.xlu0 %1000
      %1002 = vrot.lane.b32.xlu0 %v582, 16
      %v1003 = vpop.permute.xlu0 %1002
      %1004 = vrot.lane.b32.xlu0 %v585, 16
      %v1005 = vpop.permute.xlu0 %1004
      %1006 = vrot.lane.b32.xlu0 %v587, 16
      %v1007 = vpop.permute.xlu0 %1006
      %1008 = vrot.lane.b32.xlu0 %v590, 16
      %v1009 = vpop.permute.xlu0 %1008
      %1010 = vrot.lane.b32.xlu0 %v592, 16
      %v1011 = vpop.permute.xlu0 %1010
      %1012 = vrot.lane.b32.xlu0 %v949, 16
      %v1013 = vpop.permute.xlu0 %1012
      %1014 = vrot.lane.b32.xlu0 %v951, 16
      %v1015 = vpop.permute.xlu0 %1014
      %v1048 = vrot.slane %v470, 2
      %v1049 = vrot.slane %v375, 2
      %v1050 = vsel %vm683, %v1048, %v1049
      %v1051 = vrot.slane %v486, 2
      %v1052 = vsel %vm683, %v1049, %v1051
      %1053 = vrot.lane.b32.xlu0 %v691, 20
      %v1054 = vpop.permute.xlu0 %1053
      %1055 = vrot.lane.b32.xlu0 %v693, 20
      %v1056 = vpop.permute.xlu0 %1055
      %1057 = vrot.lane.b32.xlu0 %v686, 20
      %v1058 = vpop.permute.xlu0 %1057
      %1059 = vrot.lane.b32.xlu0 %v688, 20
      %v1060 = vpop.permute.xlu0 %1059
      %1061 = vrot.lane.b32.xlu0 %v696, 20
      %v1062 = vpop.permute.xlu0 %1061
      %1063 = vrot.lane.b32.xlu0 %v698, 20
      %v1064 = vpop.permute.xlu0 %1063
      %1065 = vrot.lane.b32.xlu0 %v701, 20
      %v1066 = vpop.permute.xlu0 %1065
      %1067 = vrot.lane.b32.xlu0 %v703, 20
      %v1068 = vpop.permute.xlu0 %1067
      %1069 = vrot.lane.b32.xlu0 %v706, 20
      %v1070 = vpop.permute.xlu0 %1069
      %1071 = vrot.lane.b32.xlu0 %v708, 20
      %v1072 = vpop.permute.xlu0 %1071
      %1073 = vrot.lane.b32.xlu0 %v711, 20
      %v1074 = vpop.permute.xlu0 %1073
      %1075 = vrot.lane.b32.xlu0 %v713, 20
      %v1076 = vpop.permute.xlu0 %1075
      %1077 = vrot.lane.b32.xlu0 %v716, 20
      %v1078 = vpop.permute.xlu0 %1077
      %1079 = vrot.lane.b32.xlu0 %v718, 20
      %v1080 = vpop.permute.xlu0 %1079
      %1081 = vrot.lane.b32.xlu0 %v721, 20
      %v1082 = vpop.permute.xlu0 %1081
      %1083 = vrot.lane.b32.xlu0 %v723, 20
      %v1084 = vpop.permute.xlu0 %1083
      %1085 = vrot.lane.b32.xlu0 %v726, 20
      %v1086 = vpop.permute.xlu0 %1085
      %1087 = vrot.lane.b32.xlu0 %v728, 20
      %v1088 = vpop.permute.xlu0 %1087
      %1089 = vrot.lane.b32.xlu0 %v731, 20
      %v1090 = vpop.permute.xlu0 %1089
      %1091 = vrot.lane.b32.xlu0 %v733, 20
      %v1092 = vpop.permute.xlu0 %1091
      %1093 = vrot.lane.b32.xlu0 %v736, 20
      %v1094 = vpop.permute.xlu0 %1093
      %1095 = vrot.lane.b32.xlu0 %v738, 20
      %v1096 = vpop.permute.xlu0 %1095
      %1097 = vrot.lane.b32.xlu0 %v741, 20
      %v1098 = vpop.permute.xlu0 %1097
      %1099 = vrot.lane.b32.xlu0 %v743, 20
      %v1100 = vpop.permute.xlu0 %1099
      %1101 = vrot.lane.b32.xlu0 %v746, 20
      %v1102 = vpop.permute.xlu0 %1101
      %1103 = vrot.lane.b32.xlu0 %v748, 20
      %v1104 = vpop.permute.xlu0 %1103
      %1105 = vrot.lane.b32.xlu0 %v751, 20
      %v1106 = vpop.permute.xlu0 %1105
      %1107 = vrot.lane.b32.xlu0 %v753, 20
      %v1108 = vpop.permute.xlu0 %1107
      %1109 = vrot.lane.b32.xlu0 %v756, 20
      %v1110 = vpop.permute.xlu0 %1109
      %1111 = vrot.lane.b32.xlu0 %v758, 20
      %v1112 = vpop.permute.xlu0 %1111
      %1113 = vrot.lane.b32.xlu0 %v1050, 20
      %v1114 = vpop.permute.xlu0 %1113
      %1115 = vrot.lane.b32.xlu0 %v1052, 20
      %v1116 = vpop.permute.xlu0 %1115
      %1149 = vrot.lane.b32.xlu0 %v455, 24
      %v1150 = vpop.permute.xlu0 %1149
      %1151 = vrot.lane.b32.xlu0 %v330, 24
      %v1152 = vpop.permute.xlu0 %1151
      %1153 = vrot.lane.b32.xlu0 %v457, 24
      %v1154 = vpop.permute.xlu0 %1153
      %1155 = vrot.lane.b32.xlu0 %v336, 24
      %v1156 = vpop.permute.xlu0 %1155
      %1157 = vrot.lane.b32.xlu0 %v458, 24
      %v1158 = vpop.permute.xlu0 %1157
      %1159 = vrot.lane.b32.xlu0 %v339, 24
      %v1160 = vpop.permute.xlu0 %1159
      %1161 = vrot.lane.b32.xlu0 %v459, 24
      %v1162 = vpop.permute.xlu0 %1161
      %1163 = vrot.lane.b32.xlu0 %v342, 24
      %v1164 = vpop.permute.xlu0 %1163
      %1165 = vrot.lane.b32.xlu0 %v460, 24
      %v1166 = vpop.permute.xlu0 %1165
      %1167 = vrot.lane.b32.xlu0 %v345, 24
      %v1168 = vpop.permute.xlu0 %1167
      %1169 = vrot.lane.b32.xlu0 %v461, 24
      %v1170 = vpop.permute.xlu0 %1169
      %1171 = vrot.lane.b32.xlu0 %v348, 24
      %v1172 = vpop.permute.xlu0 %1171
      %1173 = vrot.lane.b32.xlu0 %v462, 24
      %v1174 = vpop.permute.xlu0 %1173
      %1175 = vrot.lane.b32.xlu0 %v351, 24
      %v1176 = vpop.permute.xlu0 %1175
      %1177 = vrot.lane.b32.xlu0 %v463, 24
      %v1178 = vpop.permute.xlu0 %1177
      %1179 = vrot.lane.b32.xlu0 %v354, 24
      %v1180 = vpop.permute.xlu0 %1179
      %1181 = vrot.lane.b32.xlu0 %v464, 24
      %v1182 = vpop.permute.xlu0 %1181
      %1183 = vrot.lane.b32.xlu0 %v357, 24
      %v1184 = vpop.permute.xlu0 %1183
      %1185 = vrot.lane.b32.xlu0 %v465, 24
      %v1186 = vpop.permute.xlu0 %1185
      %1187 = vrot.lane.b32.xlu0 %v360, 24
      %v1188 = vpop.permute.xlu0 %1187
      %1189 = vrot.lane.b32.xlu0 %v466, 24
      %v1190 = vpop.permute.xlu0 %1189
      %1191 = vrot.lane.b32.xlu0 %v363, 24
      %v1192 = vpop.permute.xlu0 %1191
      %1193 = vrot.lane.b32.xlu0 %v467, 24
      %v1194 = vpop.permute.xlu0 %1193
      %1195 = vrot.lane.b32.xlu0 %v366, 24
      %v1196 = vpop.permute.xlu0 %1195
      %1197 = vrot.lane.b32.xlu0 %v468, 24
      %v1198 = vpop.permute.xlu0 %1197
      %1199 = vrot.lane.b32.xlu0 %v369, 24
      %v1200 = vpop.permute.xlu0 %1199
      %1201 = vrot.lane.b32.xlu0 %v469, 24
      %v1202 = vpop.permute.xlu0 %1201
      %1203 = vrot.lane.b32.xlu0 %v372, 24
      %v1204 = vpop.permute.xlu0 %1203
      %1205 = vrot.lane.b32.xlu0 %v470, 24
      %v1206 = vpop.permute.xlu0 %1205
      %1207 = vrot.lane.b32.xlu0 %v375, 24
      %v1208 = vpop.permute.xlu0 %1207
      %1239 = vrot.lane.b32.xlu0 %v520, 28
      %v1240 = vpop.permute.xlu0 %1239
      %1241 = vrot.lane.b32.xlu0 %v522, 28
      %v1242 = vpop.permute.xlu0 %1241
      %1243 = vrot.lane.b32.xlu0 %v530, 28
      %v1244 = vpop.permute.xlu0 %1243
      %1245 = vrot.lane.b32.xlu0 %v532, 28
      %v1246 = vpop.permute.xlu0 %1245
      %1247 = vrot.lane.b32.xlu0 %v535, 28
      %v1248 = vpop.permute.xlu0 %1247
      %1249 = vrot.lane.b32.xlu0 %v537, 28
      %v1250 = vpop.permute.xlu0 %1249
      %1251 = vrot.lane.b32.xlu0 %v540, 28
      %v1252 = vpop.permute.xlu0 %1251
      %1253 = vrot.lane.b32.xlu0 %v542, 28
      %v1254 = vpop.permute.xlu0 %1253
      %1255 = vrot.lane.b32.xlu0 %v545, 28
      %v1256 = vpop.permute.xlu0 %1255
      %1257 = vrot.lane.b32.xlu0 %v547, 28
      %v1258 = vpop.permute.xlu0 %1257
      %1259 = vrot.lane.b32.xlu0 %v550, 28
      %v1260 = vpop.permute.xlu0 %1259
      %1261 = vrot.lane.b32.xlu0 %v552, 28
      %v1262 = vpop.permute.xlu0 %1261
      %1263 = vrot.lane.b32.xlu0 %v555, 28
      %v1264 = vpop.permute.xlu0 %1263
      %1265 = vrot.lane.b32.xlu0 %v557, 28
      %v1266 = vpop.permute.xlu0 %1265
      %1267 = vrot.lane.b32.xlu0 %v560, 28
      %v1268 = vpop.permute.xlu0 %1267
      %1269 = vrot.lane.b32.xlu0 %v562, 28
      %v1270 = vpop.permute.xlu0 %1269
      %1271 = vrot.lane.b32.xlu0 %v565, 28
      %v1272 = vpop.permute.xlu0 %1271
      %1273 = vrot.lane.b32.xlu0 %v567, 28
      %v1274 = vpop.permute.xlu0 %1273
      %1275 = vrot.lane.b32.xlu0 %v570, 28
      %v1276 = vpop.permute.xlu0 %1275
      %1277 = vrot.lane.b32.xlu0 %v572, 28
      %v1278 = vpop.permute.xlu0 %1277
      %1279 = vrot.lane.b32.xlu0 %v575, 28
      %v1280 = vpop.permute.xlu0 %1279
      %1281 = vrot.lane.b32.xlu0 %v577, 28
      %v1282 = vpop.permute.xlu0 %1281
      %1283 = vrot.lane.b32.xlu0 %v580, 28
      %v1284 = vpop.permute.xlu0 %1283
      %1285 = vrot.lane.b32.xlu0 %v582, 28
      %v1286 = vpop.permute.xlu0 %1285
      %1287 = vrot.lane.b32.xlu0 %v585, 28
      %v1288 = vpop.permute.xlu0 %1287
      %1289 = vrot.lane.b32.xlu0 %v587, 28
      %v1290 = vpop.permute.xlu0 %1289
      %1291 = vrot.lane.b32.xlu0 %v590, 28
      %v1292 = vpop.permute.xlu0 %1291
      %1293 = vrot.lane.b32.xlu0 %v592, 28
      %v1294 = vpop.permute.xlu0 %1293
      %1295 = vrot.lane.b32.xlu0 %v949, 28
      %v1296 = vpop.permute.xlu0 %1295
      %1297 = vrot.lane.b32.xlu0 %v951, 28
      %v1298 = vpop.permute.xlu0 %1297
      %1329 = vrot.lane.b32.xlu0 %v686, 32
      %v1330 = vpop.permute.xlu0 %1329
      %1331 = vrot.lane.b32.xlu0 %v688, 32
      %v1332 = vpop.permute.xlu0 %1331
      %1333 = vrot.lane.b32.xlu0 %v696, 32
      %v1334 = vpop.permute.xlu0 %1333
      %1335 = vrot.lane.b32.xlu0 %v698, 32
      %v1336 = vpop.permute.xlu0 %1335
      %1337 = vrot.lane.b32.xlu0 %v701, 32
      %v1338 = vpop.permute.xlu0 %1337
      %1339 = vrot.lane.b32.xlu0 %v703, 32
      %v1340 = vpop.permute.xlu0 %1339
      %1341 = vrot.lane.b32.xlu0 %v706, 32
      %v1342 = vpop.permute.xlu0 %1341
      %1343 = vrot.lane.b32.xlu0 %v708, 32
      %v1344 = vpop.permute.xlu0 %1343
      %1345 = vrot.lane.b32.xlu0 %v711, 32
      %v1346 = vpop.permute.xlu0 %1345
      %1347 = vrot.lane.b32.xlu0 %v713, 32
      %v1348 = vpop.permute.xlu0 %1347
      %1349 = vrot.lane.b32.xlu0 %v716, 32
      %v1350 = vpop.permute.xlu0 %1349
      %1351 = vrot.lane.b32.xlu0 %v718, 32
      %v1352 = vpop.permute.xlu0 %1351
      %1353 = vrot.lane.b32.xlu0 %v721, 32
      %v1354 = vpop.permute.xlu0 %1353
      %1355 = vrot.lane.b32.xlu0 %v723, 32
      %v1356 = vpop.permute.xlu0 %1355
      %1357 = vrot.lane.b32.xlu0 %v726, 32
      %v1358 = vpop.permute.xlu0 %1357
      %1359 = vrot.lane.b32.xlu0 %v728, 32
      %v1360 = vpop.permute.xlu0 %1359
      %1361 = vrot.lane.b32.xlu0 %v731, 32
      %v1362 = vpop.permute.xlu0 %1361
      %1363 = vrot.lane.b32.xlu0 %v733, 32
      %v1364 = vpop.permute.xlu0 %1363
      %1365 = vrot.lane.b32.xlu0 %v736, 32
      %v1366 = vpop.permute.xlu0 %1365
      %1367 = vrot.lane.b32.xlu0 %v738, 32
      %v1368 = vpop.permute.xlu0 %1367
      %1369 = vrot.lane.b32.xlu0 %v741, 32
      %v1370 = vpop.permute.xlu0 %1369
      %1371 = vrot.lane.b32.xlu0 %v743, 32
      %v1372 = vpop.permute.xlu0 %1371
      %1373 = vrot.lane.b32.xlu0 %v746, 32
      %v1374 = vpop.permute.xlu0 %1373
      %1375 = vrot.lane.b32.xlu0 %v748, 32
      %v1376 = vpop.permute.xlu0 %1375
      %1377 = vrot.lane.b32.xlu0 %v751, 32
      %v1378 = vpop.permute.xlu0 %1377
      %1379 = vrot.lane.b32.xlu0 %v753, 32
      %v1380 = vpop.permute.xlu0 %1379
      %1381 = vrot.lane.b32.xlu0 %v756, 32
      %v1382 = vpop.permute.xlu0 %1381
      %1383 = vrot.lane.b32.xlu0 %v758, 32
      %v1384 = vpop.permute.xlu0 %1383
      %1385 = vrot.lane.b32.xlu0 %v1050, 32
      %v1386 = vpop.permute.xlu0 %1385
      %1387 = vrot.lane.b32.xlu0 %v1052, 32
      %v1388 = vpop.permute.xlu0 %1387
      %vm1419 = vcmask 31744
      %v1420 = vsel %vm1419, %v455, %v594
      %v1421 = vsel %vm1419, %v330, %v596
      %v1422 = vsel %vm1419, %v456, %v598
      %v1423 = vsel %vm1419, %v333, %v600
      %v1424 = vsel %vm1419, %v457, %v602
      %v1425 = vsel %vm1419, %v336, %v604
      %v1426 = vsel %vm1419, %v458, %v606
      %v1427 = vsel %vm1419, %v339, %v608
      %v1428 = vsel %vm1419, %v459, %v610
      %v1429 = vsel %vm1419, %v342, %v612
      %v1430 = vsel %vm1419, %v460, %v614
      %v1431 = vsel %vm1419, %v345, %v616
      %v1432 = vsel %vm1419, %v461, %v618
      %v1433 = vsel %vm1419, %v348, %v620
      %v1434 = vsel %vm1419, %v462, %v622
      %v1435 = vsel %vm1419, %v351, %v624
      %v1436 = vsel %vm1419, %v463, %v626
      %v1437 = vsel %vm1419, %v354, %v628
      %v1438 = vsel %vm1419, %v464, %v630
      %v1439 = vsel %vm1419, %v357, %v632
      %v1440 = vsel %vm1419, %v465, %v634
      %v1441 = vsel %vm1419, %v360, %v636
      %v1442 = vsel %vm1419, %v466, %v638
      %v1443 = vsel %vm1419, %v363, %v640
      %v1444 = vsel %vm1419, %v467, %v642
      %v1445 = vsel %vm1419, %v366, %v644
      %v1446 = vsel %vm1419, %v468, %v646
      %v1447 = vsel %vm1419, %v369, %v648
      %v1448 = vsel %vm1419, %v469, %v650
      %v1449 = vsel %vm1419, %v372, %v652
      %vm1450 = vcmask 64512
      %v1451 = vsel %vm1450, %v1420, %v760
      %v1452 = vsel %vm1450, %v1421, %v762
      %v1453 = vsel %vm1450, %v1422, %v764
      %v1454 = vsel %vm1450, %v1423, %v766
      %v1455 = vsel %vm1450, %v1424, %v768
      %v1456 = vsel %vm1450, %v1425, %v770
      %v1457 = vsel %vm1450, %v1426, %v772
      %v1458 = vsel %vm1450, %v1427, %v774
      %v1459 = vsel %vm1450, %v1428, %v776
      %v1460 = vsel %vm1450, %v1429, %v778
      %v1461 = vsel %vm1450, %v1430, %v780
      %v1462 = vsel %vm1450, %v1431, %v782
      %v1463 = vsel %vm1450, %v1432, %v784
      %v1464 = vsel %vm1450, %v1433, %v786
      %v1465 = vsel %vm1450, %v1434, %v788
      %v1466 = vsel %vm1450, %v1435, %v790
      %v1467 = vsel %vm1450, %v1436, %v792
      %v1468 = vsel %vm1450, %v1437, %v794
      %v1469 = vsel %vm1450, %v1438, %v796
      %v1470 = vsel %vm1450, %v1439, %v798
      %v1471 = vsel %vm1450, %v1440, %v800
      %v1472 = vsel %vm1450, %v1441, %v802
      %v1473 = vsel %vm1450, %v1442, %v804
      %v1474 = vsel %vm1450, %v1443, %v806
      %v1475 = vsel %vm1450, %v1444, %v808
      %v1476 = vsel %vm1450, %v1445, %v810
      %v1477 = vsel %vm1450, %v1446, %v812
      %v1478 = vsel %vm1450, %v1447, %v814
      %v1479 = vsel %vm1450, %v1448, %v816
      %v1480 = vsel %vm1450, %v1449, %v818
      %vm1481 = vcmask 97280
      %v1482 = vsel %vm1481, %v1451, %v851
      %v1483 = vsel %vm1481, %v1452, %v853
      %v1484 = vsel %vm1481, %v1453, %v855
      %v1485 = vsel %vm1481, %v1454, %v857
      %v1486 = vsel %vm1481, %v1451, %v859
      %v1487 = vsel %vm1481, %v1452, %v861
      %v1488 = vsel %vm1481, %v1455, %v863
      %v1489 = vsel %vm1481, %v1456, %v865
      %v1490 = vsel %vm1481, %v1457, %v867
      %v1491 = vsel %vm1481, %v1458, %v869
      %v1492 = vsel %vm1481, %v1459, %v871
      %v1493 = vsel %vm1481, %v1460, %v873
      %v1494 = vsel %vm1481, %v1461, %v875
      %v1495 = vsel %vm1481, %v1462, %v877
      %v1496 = vsel %vm1481, %v1463, %v879
      %v1497 = vsel %vm1481, %v1464, %v881
      %v1498 = vsel %vm1481, %v1465, %v883
      %v1499 = vsel %vm1481, %v1466, %v885
      %v1500 = vsel %vm1481, %v1467, %v887
      %v1501 = vsel %vm1481, %v1468, %v889
      %v1502 = vsel %vm1481, %v1469, %v891
      %v1503 = vsel %vm1481, %v1470, %v893
      %v1504 = vsel %vm1481, %v1471, %v895
      %v1505 = vsel %vm1481, %v1472, %v897
      %v1506 = vsel %vm1481, %v1473, %v899
      %v1507 = vsel %vm1481, %v1474, %v901
      %v1508 = vsel %vm1481, %v1475, %v903
      %v1509 = vsel %vm1481, %v1476, %v905
      %v1510 = vsel %vm1481, %v1477, %v907
      %v1511 = vsel %vm1481, %v1478, %v909
      %v1512 = vsel %vm1481, %v1479, %v911
      %v1513 = vsel %vm1481, %v1480, %v913
      %vm1514 = vcmask 130048
      %v1515 = vsel %vm1514, %v1482, %v953
      %v1516 = vsel %vm1514, %v1483, %v955
      %v1517 = vsel %vm1514, %v1484, %v957
      %v1518 = vsel %vm1514, %v1485, %v959
      %v1519 = vsel %vm1514, %v1486, %v961
      %v1520 = vsel %vm1514, %v1487, %v963
      %v1521 = vsel %vm1514, %v1488, %v965
      %v1522 = vsel %vm1514, %v1489, %v967
      %v1523 = vsel %vm1514, %v1490, %v969
      %v1524 = vsel %vm1514, %v1491, %v971
      %v1525 = vsel %vm1514, %v1492, %v973
      %v1526 = vsel %vm1514, %v1493, %v975
      %v1527 = vsel %vm1514, %v1494, %v977
      %v1528 = vsel %vm1514, %v1495, %v979
      %v1529 = vsel %vm1514, %v1496, %v981
      %v1530 = vsel %vm1514, %v1497, %v983
      %v1531 = vsel %vm1514, %v1498, %v985
      %v1532 = vsel %vm1514, %v1499, %v987
      %v1533 = vsel %vm1514, %v1500, %v989
      %v1534 = vsel %vm1514, %v1501, %v991
      %v1535 = vsel %vm1514, %v1502, %v993
      %v1536 = vsel %vm1514, %v1503, %v995
      %v1537 = vsel %vm1514, %v1504, %v997
      %v1538 = vsel %vm1514, %v1505, %v999
      %v1539 = vsel %vm1514, %v1506, %v1001
      %v1540 = vsel %vm1514, %v1507, %v1003
      %v1541 = vsel %vm1514, %v1508, %v1005
      %v1542 = vsel %vm1514, %v1509, %v1007
      %v1543 = vsel %vm1514, %v1510, %v1009
      %v1544 = vsel %vm1514, %v1511, %v1011
      %v1545 = vsel %vm1514, %v1512, %v1013
      %v1546 = vsel %vm1514, %v1513, %v1015
      %vm1547 = vcmask 162816
      %v1548 = vsel %vm1547, %v1515, %v1054
      %v1549 = vsel %vm1547, %v1516, %v1056
      %v1550 = vsel %vm1547, %v1517, %v1058
      %v1551 = vsel %vm1547, %v1518, %v1060
      %v1552 = vsel %vm1547, %v1519, %v1062
      %v1553 = vsel %vm1547, %v1520, %v1064
      %v1554 = vsel %vm1547, %v1521, %v1066
      %v1555 = vsel %vm1547, %v1522, %v1068
      %v1556 = vsel %vm1547, %v1523, %v1070
      %v1557 = vsel %vm1547, %v1524, %v1072
      %v1558 = vsel %vm1547, %v1525, %v1074
      %v1559 = vsel %vm1547, %v1526, %v1076
      %v1560 = vsel %vm1547, %v1527, %v1078
      %v1561 = vsel %vm1547, %v1528, %v1080
      %v1562 = vsel %vm1547, %v1529, %v1082
      %v1563 = vsel %vm1547, %v1530, %v1084
      %v1564 = vsel %vm1547, %v1531, %v1086
      %v1565 = vsel %vm1547, %v1532, %v1088
      %v1566 = vsel %vm1547, %v1533, %v1090
      %v1567 = vsel %vm1547, %v1534, %v1092
      %v1568 = vsel %vm1547, %v1535, %v1094
      %v1569 = vsel %vm1547, %v1536, %v1096
      %v1570 = vsel %vm1547, %v1537, %v1098
      %v1571 = vsel %vm1547, %v1538, %v1100
      %v1572 = vsel %vm1547, %v1539, %v1102
      %v1573 = vsel %vm1547, %v1540, %v1104
      %v1574 = vsel %vm1547, %v1541, %v1106
      %v1575 = vsel %vm1547, %v1542, %v1108
      %v1576 = vsel %vm1547, %v1543, %v1110
      %v1577 = vsel %vm1547, %v1544, %v1112
      %v1578 = vsel %vm1547, %v1545, %v1114
      %v1579 = vsel %vm1547, %v1546, %v1116
      %vm1580 = vcmask 195584
      %v1581 = vsel %vm1580, %v1548, %v1150
      %v1582 = vsel %vm1580, %v1549, %v1152
      %v1583 = vsel %vm1580, %v1550, %v1154
      %v1584 = vsel %vm1580, %v1551, %v1156
      %v1585 = vsel %vm1580, %v1552, %v1158
      %v1586 = vsel %vm1580, %v1553, %v1160
      %v1587 = vsel %vm1580, %v1554, %v1162
      %v1588 = vsel %vm1580, %v1555, %v1164
      %v1589 = vsel %vm1580, %v1556, %v1166
      %v1590 = vsel %vm1580, %v1557, %v1168
      %v1591 = vsel %vm1580, %v1558, %v1170
      %v1592 = vsel %vm1580, %v1559, %v1172
      %v1593 = vsel %vm1580, %v1560, %v1174
      %v1594 = vsel %vm1580, %v1561, %v1176
      %v1595 = vsel %vm1580, %v1562, %v1178
      %v1596 = vsel %vm1580, %v1563, %v1180
      %v1597 = vsel %vm1580, %v1564, %v1182
      %v1598 = vsel %vm1580, %v1565, %v1184
      %v1599 = vsel %vm1580, %v1566, %v1186
      %v1600 = vsel %vm1580, %v1567, %v1188
      %v1601 = vsel %vm1580, %v1568, %v1190
      %v1602 = vsel %vm1580, %v1569, %v1192
      %v1603 = vsel %vm1580, %v1570, %v1194
      %v1604 = vsel %vm1580, %v1571, %v1196
      %v1605 = vsel %vm1580, %v1572, %v1198
      %v1606 = vsel %vm1580, %v1573, %v1200
      %v1607 = vsel %vm1580, %v1574, %v1202
      %v1608 = vsel %vm1580, %v1575, %v1204
      %v1609 = vsel %vm1580, %v1576, %v1206
      %v1610 = vsel %vm1580, %v1577, %v1208
      %v1611 = vsel %vm1580, %v1578, %v1202
      %v1612 = vsel %vm1580, %v1579, %v1204
      %vm1613 = vcmask 228352
      %v1614 = vsel %vm1613, %v1581, %v1240
      %v1615 = vsel %vm1613, %v1582, %v1242
      %v1616 = vsel %vm1613, %v1583, %v1244
      %v1617 = vsel %vm1613, %v1584, %v1246
      %v1618 = vsel %vm1613, %v1585, %v1248
      %v1619 = vsel %vm1613, %v1586, %v1250
      %v1620 = vsel %vm1613, %v1587, %v1252
      %v1621 = vsel %vm1613, %v1588, %v1254
      %v1622 = vsel %vm1613, %v1589, %v1256
      %v1623 = vsel %vm1613, %v1590, %v1258
      %v1624 = vsel %vm1613, %v1591, %v1260
      %v1625 = vsel %vm1613, %v1592, %v1262
      %v1626 = vsel %vm1613, %v1593, %v1264
      %v1627 = vsel %vm1613, %v1594, %v1266
      %v1628 = vsel %vm1613, %v1595, %v1268
      %v1629 = vsel %vm1613, %v1596, %v1270
      %v1630 = vsel %vm1613, %v1597, %v1272
      %v1631 = vsel %vm1613, %v1598, %v1274
      %v1632 = vsel %vm1613, %v1599, %v1276
      %v1633 = vsel %vm1613, %v1600, %v1278
      %v1634 = vsel %vm1613, %v1601, %v1280
      %v1635 = vsel %vm1613, %v1602, %v1282
      %v1636 = vsel %vm1613, %v1603, %v1284
      %v1637 = vsel %vm1613, %v1604, %v1286
      %v1638 = vsel %vm1613, %v1605, %v1288
      %v1639 = vsel %vm1613, %v1606, %v1290
      %v1640 = vsel %vm1613, %v1607, %v1292
      %v1641 = vsel %vm1613, %v1608, %v1294
      %v1642 = vsel %vm1613, %v1609, %v1296
      %v1643 = vsel %vm1613, %v1610, %v1298
      %v1644 = vsel %vm1613, %v1611, %v1292
      %v1645 = vsel %vm1613, %v1612, %v1294
      %vm1646 = vcmask 261120
      %v1647 = vsel %vm1646, %v1614, %v1330
      %v1648 = vsel %vm1646, %v1615, %v1332
      %v1649 = vsel %vm1646, %v1616, %v1334
      %v1650 = vsel %vm1646, %v1617, %v1336
      %v1651 = vsel %vm1646, %v1618, %v1338
      %v1652 = vsel %vm1646, %v1619, %v1340
      %v1653 = vsel %vm1646, %v1620, %v1342
      %v1654 = vsel %vm1646, %v1621, %v1344
      %v1655 = vsel %vm1646, %v1622, %v1346
      %v1656 = vsel %vm1646, %v1623, %v1348
      %v1657 = vsel %vm1646, %v1624, %v1350
      %v1658 = vsel %vm1646, %v1625, %v1352
      %v1659 = vsel %vm1646, %v1626, %v1354
      %v1660 = vsel %vm1646, %v1627, %v1356
      %v1661 = vsel %vm1646, %v1628, %v1358
      %v1662 = vsel %vm1646, %v1629, %v1360
      %v1663 = vsel %vm1646, %v1630, %v1362
      %v1664 = vsel %vm1646, %v1631, %v1364
      %v1665 = vsel %vm1646, %v1632, %v1366
      %v1666 = vsel %vm1646, %v1633, %v1368
      %v1667 = vsel %vm1646, %v1634, %v1370
      %v1668 = vsel %vm1646, %v1635, %v1372
      %v1669 = vsel %vm1646, %v1636, %v1374
      %v1670 = vsel %vm1646, %v1637, %v1376
      %v1671 = vsel %vm1646, %v1638, %v1378
      %v1672 = vsel %vm1646, %v1639, %v1380
      %v1673 = vsel %vm1646, %v1640, %v1382
      %v1674 = vsel %vm1646, %v1641, %v1384
      %v1675 = vsel %vm1646, %v1642, %v1386
      %v1676 = vsel %vm1646, %v1643, %v1388
      %v1677 = vsel %vm1646, %v1644, %v1382
      %v1678 = vsel %vm1646, %v1645, %v1384
      %v1680 = vlaneseq
      %v1681 = vshrl.u32 %v1680, 7
      %v1682 = vsub.s32 0, %v1681
      %v1683 = vrot.slane %v262, %v1682
      %vm1685 = vcmask 293888
      %v1687 = vsel %vm1685, %v1647, 0
      %v1690 = vsel %vm1685, %v1648, 0
      %v1693 = vsel %vm1685, %v1649, 0
      %v1696 = vsel %vm1685, %v1650, 0
      %v1699 = vsel %vm1685, %v1651, 0
      %v1702 = vsel %vm1685, %v1652, 0
      %v1705 = vsel %vm1685, %v1653, 0
      %v1708 = vsel %vm1685, %v1654, 0
      %v1711 = vsel %vm1685, %v1655, 0
      %v1714 = vsel %vm1685, %v1656, 0
      %v1717 = vsel %vm1685, %v1657, 0
      %v1720 = vsel %vm1685, %v1658, 0
      %v1723 = vsel %vm1685, %v1659, 0
      %v1726 = vsel %vm1685, %v1660, 0
      %v1729 = vsel %vm1685, %v1661, 0
      %v1732 = vsel %vm1685, %v1662, 0
      %v1735 = vsel %vm1685, %v1663, 0
      %v1738 = vsel %vm1685, %v1664, 0
      %v1741 = vsel %vm1685, %v1665, 0
      %v1744 = vsel %vm1685, %v1666, 0
      %v1747 = vsel %vm1685, %v1667, 0
      %v1750 = vsel %vm1685, %v1668, 0
      %v1753 = vsel %vm1685, %v1669, 0
      %v1756 = vsel %vm1685, %v1670, 0
      %v1759 = vsel %vm1685, %v1671, 0
      %v1762 = vsel %vm1685, %v1672, 0
      %v1765 = vsel %vm1685, %v1673, 0
      %v1768 = vsel %vm1685, %v1674, 0
      %v1771 = vsel %vm1685, %v1675, 0
      %v1774 = vsel %vm1685, %v1676, 0
      %v1777 = vsel %vm1685, %v1677, 0
      %v1780 = vsel %vm1685, %v1678, 0
      %vm1782 = vcmask 1043456
      %v1784 = vsel %vm1782, %v261, 0
      %1786 = vmatprep.subr.mxu0 0.0
      %1787 = vmatpush1.msra.mxu0 %v257
      %1788 = vmatprep.subr.mxu0 0.0
      %1789 = vmatpush1.msra.mxu0 %v258
      %1790 = vmatprep.subr.mxu0 0.0
      %1791 = vmatpush1.msra.mxu0 %v259
      %1792 = vmatprep.subr.mxu0 0.0
      %1793 = vmatpush1.msra.mxu0 %v260
      %1794 = vmatprep.subr.mxu0 0.0
      %1795 = vmatpush1.msra.mxu0 %v1784
      %1796 = vmatprep.subr.mxu0 0.0
      %1797 = vmatpush1.msra.mxu0 0.0
      %1798 = vmatprep.subr.mxu0 0.0
      %1799 = vmatpush1.msra.mxu0 0.0
      %1800 = vmatprep.subr.mxu0 0.0
      %1801 = vmatpush1.msra.mxu0 0.0
      %1802 = vmatprep.subr.mxu0 0.0
      %1803 = vmatpush1.msra.mxu0 0.0
      %1804 = vmatprep.subr.mxu0 0.0
      %1805 = vmatpush1.msra.mxu0 0.0
      %1806 = vmatprep.subr.mxu0 0.0
      %1807 = vmatpush1.msra.mxu0 0.0
      %1808 = vmatprep.subr.mxu0 0.0
      %1809 = vmatpush1.msra.mxu0 0.0
      %1810 = vmatprep.subr.mxu0 0.0
      %1811 = vmatpush1.msra.mxu0 0.0
      %1812 = vmatprep.subr.mxu0 0.0
      %1813 = vmatpush1.msra.mxu0 0.0
      %1814 = vmatprep.subr.mxu0 0.0
      %1815 = vmatpush1.msra.mxu0 0.0
      %1816 = vmatprep.subr.mxu0 0.0
      %1817 = vmatpush1.msra.mxu0 0.0
      %1818 = vmatprep.subr.mxu0 0.0
      %1819 = vmatpush1.msra.mxu0 0.0
      %1820 = vmatprep.subr.mxu0 0.0
      %1821 = vmatpush1.msra.mxu0 0.0
      %1822 = vmatprep.subr.mxu0 0.0
      %1823 = vmatpush1.msra.mxu0 0.0
      %1824 = vmatprep.subr.mxu0 0.0
      %1825 = vmatpush1.msra.mxu0 0.0
      %1826 = vmatprep.subr.mxu0 0.0
      %1827 = vmatpush1.msra.mxu0 0.0
      %1828 = vmatprep.subr.mxu0 0.0
      %1829 = vmatpush1.msra.mxu0 0.0
      %1830 = vmatprep.subr.mxu0 0.0
      %1831 = vmatpush1.msra.mxu0 0.0
      %1832 = vmatprep.subr.mxu0 0.0
      %1833 = vmatpush1.msra.mxu0 0.0
      %1834 = vmatprep.subr.mxu0 0.0
      %1835 = vmatpush1.msra.mxu0 0.0
      %1836 = vmatprep.subr.mxu0 0.0
      %1837 = vmatpush1.msra.mxu0 0.0
      %1838 = vmatprep.subr.mxu0 0.0
      %1839 = vmatpush1.msra.mxu0 0.0
      %1840 = vmatprep.subr.mxu0 0.0
      %1841 = vmatpush1.msra.mxu0 0.0
      %1842 = vmatprep.subr.mxu0 0.0
      %1843 = vmatpush1.msra.mxu0 0.0
      %1844 = vmatprep.subr.mxu0 0.0
      %1845 = vmatpush1.msra.mxu0 0.0
      %1846 = vmatprep.subr.mxu0 0.0
      %1847 = vmatpush1.msra.mxu0 0.0
      %1848 = vmatprep.subr.mxu0 0.0
      %1849 = vmatpush1.msra.mxu0 0.0
      %1850 = vmatprep.mubr.f32.mxu0 0.0
      %1851 = vmatmul.mubr.f32.gmra.mrb[0].mxu0 %v1687
      %v1852 = vpop.f32.mrb[0].mxu0
      %v1853 = vadd.f32 %v1683, %v1852
      %v1854 = vpop.f32.mrb[0].mxu0
      %1855 = vmatprep.mubr.f32.mxu0 0.0
      %1856 = vmatmul.mubr.f32.gmra.mrb[0].mxu0 %v1690
      %v1857 = vpop.f32.mrb[0].mxu0
      %v1858 = vadd.f32 %v1683, %v1857
      %v1859 = vpop.f32.mrb[0].mxu0
      %1860 = vmatprep.mubr.f32.mxu0 0.0
      %1861 = vmatmul.mubr.f32.gmra.mrb[0].mxu0 %v1693
      %v1862 = vpop.f32.mrb[0].mxu0
      %v1863 = vadd.f32 %v1683, %v1862
      %v1864 = vpop.f32.mrb[0].mxu0
      %1865 = vmatprep.mubr.f32.mxu0 0.0
      %1866 = vmatmul.mubr.f32.gmra.mrb[0].mxu0 %v1696
      %v1867 = vpop.f32.mrb[0].mxu0
      %v1868 = vadd.f32 %v1683, %v1867
      %v1869 = vpop.f32.mrb[0].mxu0
      %1870 = vmatprep.mubr.f32.mxu0 0.0
      %1871 = vmatmul.mubr.f32.gmra.mrb[0].mxu0 %v1699
      %v1872 = vpop.f32.mrb[0].mxu0
      %v1873 = vadd.f32 %v1683, %v1872
      %v1874 = vpop.f32.mrb[0].mxu0
      %1875 = vmatprep.mubr.f32.mxu0 0.0
      %1876 = vmatmul.mubr.f32.gmra.mrb[0].mxu0 %v1702
      %v1877 = vpop.f32.mrb[0].mxu0
      %v1878 = vadd.f32 %v1683, %v1877
      %v1879 = vpop.f32.mrb[0].mxu0
      %1880 = vmatprep.mubr.f32.mxu0 0.0
      %1881 = vmatmul.mubr.f32.gmra.mrb[0].mxu0 %v1705
      %v1882 = vpop.f32.mrb[0].mxu0
      %v1883 = vadd.f32 %v1683, %v1882
      %v1884 = vpop.f32.mrb[0].mxu0
      %1885 = vmatprep.mubr.f32.mxu0 0.0
      %1886 = vmatmul.mubr.f32.gmra.mrb[0].mxu0 %v1708
      %v1887 = vpop.f32.mrb[0].mxu0
      %v1888 = vadd.f32 %v1683, %v1887
      %v1889 = vpop.f32.mrb[0].mxu0
      %1890 = vmatprep.mubr.f32.mxu0 0.0
      %1891 = vmatmul.mubr.f32.gmra.mrb[0].mxu0 %v1711
      %v1892 = vpop.f32.mrb[0].mxu0
      %v1893 = vadd.f32 %v1683, %v1892
      %v1894 = vpop.f32.mrb[0].mxu0
      %1895 = vmatprep.mubr.f32.mxu0 0.0
      %1896 = vmatmul.mubr.f32.gmra.mrb[0].mxu0 %v1714
      %v1897 = vpop.f32.mrb[0].mxu0
      %v1898 = vadd.f32 %v1683, %v1897
      %v1899 = vpop.f32.mrb[0].mxu0
      %1900 = vmatprep.mubr.f32.mxu0 0.0
      %1901 = vmatmul.mubr.f32.gmra.mrb[0].mxu0 %v1717
      %v1902 = vpop.f32.mrb[0].mxu0
      %v1903 = vadd.f32 %v1683, %v1902
      %v1904 = vpop.f32.mrb[0].mxu0
      %1905 = vmatprep.mubr.f32.mxu0 0.0
      %1906 = vmatmul.mubr.f32.gmra.mrb[0].mxu0 %v1720
      %v1907 = vpop.f32.mrb[0].mxu0
      %v1908 = vadd.f32 %v1683, %v1907
      %v1909 = vpop.f32.mrb[0].mxu0
      %1910 = vmatprep.mubr.f32.mxu0 0.0
      %1911 = vmatmul.mubr.f32.gmra.mrb[0].mxu0 %v1723
      %v1912 = vpop.f32.mrb[0].mxu0
      %v1913 = vadd.f32 %v1683, %v1912
      %v1914 = vpop.f32.mrb[0].mxu0
      %1915 = vmatprep.mubr.f32.mxu0 0.0
      %1916 = vmatmul.mubr.f32.gmra.mrb[0].mxu0 %v1726
      %v1917 = vpop.f32.mrb[0].mxu0
      %v1918 = vadd.f32 %v1683, %v1917
      %v1919 = vpop.f32.mrb[0].mxu0
      %1920 = vmatprep.mubr.f32.mxu0 0.0
      %1921 = vmatmul.mubr.f32.gmra.mrb[0].mxu0 %v1729
      %v1922 = vpop.f32.mrb[0].mxu0
      %v1923 = vadd.f32 %v1683, %v1922
      %v1924 = vpop.f32.mrb[0].mxu0
      %1925 = vmatprep.mubr.f32.mxu0 0.0
      %1926 = vmatmul.mubr.f32.gmra.mrb[0].mxu0 %v1732
      %v1927 = vpop.f32.mrb[0].mxu0
      %v1928 = vadd.f32 %v1683, %v1927
      %v1929 = vpop.f32.mrb[0].mxu0
      %1930 = vmatprep.mubr.f32.mxu0 0.0
      %1931 = vmatmul.mubr.f32.gmra.mrb[0].mxu0 %v1735
      %v1932 = vpop.f32.mrb[0].mxu0
      %v1933 = vadd.f32 %v1683, %v1932
      %v1934 = vpop.f32.mrb[0].mxu0
      %1935 = vmatprep.mubr.f32.mxu0 0.0
      %1936 = vmatmul.mubr.f32.gmra.mrb[0].mxu0 %v1738
      %v1937 = vpop.f32.mrb[0].mxu0
      %v1938 = vadd.f32 %v1683, %v1937
      %v1939 = vpop.f32.mrb[0].mxu0
      %1940 = vmatprep.mubr.f32.mxu0 0.0
      %1941 = vmatmul.mubr.f32.gmra.mrb[0].mxu0 %v1741
      %v1942 = vpop.f32.mrb[0].mxu0
      %v1943 = vadd.f32 %v1683, %v1942
      %v1944 = vpop.f32.mrb[0].mxu0
      %1945 = vmatprep.mubr.f32.mxu0 0.0
      %1946 = vmatmul.mubr.f32.gmra.mrb[0].mxu0 %v1744
      %v1947 = vpop.f32.mrb[0].mxu0
      %v1948 = vadd.f32 %v1683, %v1947
      %v1949 = vpop.f32.mrb[0].mxu0
      %1950 = vmatprep.mubr.f32.mxu0 0.0
      %1951 = vmatmul.mubr.f32.gmra.mrb[0].mxu0 %v1747
      %v1952 = vpop.f32.mrb[0].mxu0
      %v1953 = vadd.f32 %v1683, %v1952
      %v1954 = vpop.f32.mrb[0].mxu0
      %1955 = vmatprep.mubr.f32.mxu0 0.0
      %1956 = vmatmul.mubr.f32.gmra.mrb[0].mxu0 %v1750
      %v1957 = vpop.f32.mrb[0].mxu0
      %v1958 = vadd.f32 %v1683, %v1957
      %v1959 = vpop.f32.mrb[0].mxu0
      %1960 = vmatprep.mubr.f32.mxu0 0.0
      %1961 = vmatmul.mubr.f32.gmra.mrb[0].mxu0 %v1753
      %v1962 = vpop.f32.mrb[0].mxu0
      %v1963 = vadd.f32 %v1683, %v1962
      %v1964 = vpop.f32.mrb[0].mxu0
      %1965 = vmatprep.mubr.f32.mxu0 0.0
      %1966 = vmatmul.mubr.f32.gmra.mrb[0].mxu0 %v1756
      %v1967 = vpop.f32.mrb[0].mxu0
      %v1968 = vadd.f32 %v1683, %v1967
      %v1969 = vpop.f32.mrb[0].mxu0
      %1970 = vmatprep.mubr.f32.mxu0 0.0
      %1971 = vmatmul.mubr.f32.gmra.mrb[0].mxu0 %v1759
      %v1972 = vpop.f32.mrb[0].mxu0
      %v1973 = vadd.f32 %v1683, %v1972
      %v1974 = vpop.f32.mrb[0].mxu0
      %1975 = vmatprep.mubr.f32.mxu0 0.0
      %1976 = vmatmul.mubr.f32.gmra.mrb[0].mxu0 %v1762
      %v1977 = vpop.f32.mrb[0].mxu0
      %v1978 = vadd.f32 %v1683, %v1977
      %v1979 = vpop.f32.mrb[0].mxu0
      %1980 = vmatprep.mubr.f32.mxu0 0.0
      %1981 = vmatmul.mubr.f32.gmra.mrb[0].mxu0 %v1765
      %v1982 = vpop.f32.mrb[0].mxu0
      %v1983 = vadd.f32 %v1683, %v1982
      %v1984 = vpop.f32.mrb[0].mxu0
      %1985 = vmatprep.mubr.f32.mxu0 0.0
      %1986 = vmatmul.mubr.f32.gmra.mrb[0].mxu0 %v1768
      %v1987 = vpop.f32.mrb[0].mxu0
      %v1988 = vadd.f32 %v1683, %v1987
      %v1989 = vpop.f32.mrb[0].mxu0
      %1990 = vmatprep.mubr.f32.mxu0 0.0
      %1991 = vmatmul.mubr.f32.gmra.mrb[0].mxu0 %v1771
      %v1992 = vpop.f32.mrb[0].mxu0
      %v1993 = vadd.f32 %v1683, %v1992
      %v1994 = vpop.f32.mrb[0].mxu0
      %1995 = vmatprep.mubr.f32.mxu0 0.0
      %1996 = vmatmul.mubr.f32.gmra.mrb[0].mxu0 %v1774
      %v1997 = vpop.f32.mrb[0].mxu0
      %v1998 = vadd.f32 %v1683, %v1997
      %v1999 = vpop.f32.mrb[0].mxu0
      %2000 = vmatprep.mubr.f32.mxu0 0.0
      %2001 = vmatmul.mubr.f32.gmra.mrb[0].mxu0 %v1777
      %v2002 = vpop.f32.mrb[0].mxu0
      %v2003 = vadd.f32 %v1683, %v2002
      %v2004 = vpop.f32.mrb[0].mxu0
      %2005 = vmatprep.mubr.f32.mxu0 0.0
      %2006 = vmatmul.mubr.f32.gmra.mrb[0].mxu0 %v1780
      %v2007 = vpop.f32.mrb[0].mxu0
      %v2008 = vadd.f32 %v1683, %v2007
      %v2009 = vpop.f32.mrb[0].mxu0
      %2010 = vdwg.mxu0
      %v2011 = vld [vmem:[%s3] sm:$0xff]
      %v2012 = vld [vmem:[%s3 + $0x8] sm:$0xff]
      %v2013 = vld [vmem:[%s3 + $0x10] sm:$0xff]
      %v2014 = vld [vmem:[%s3 + $0x18] sm:$0xff]
      %v2015 = vld [vmem:[%s3 + $0x20] sm:$0xf]
      %v2016 = vld [vmem:[%s4] sm:$0x1]
      %v2033 = vrot.slane %v1863, 1
      %v2034 = vrot.slane %v1853, 1
      %v2035 = vrot.slane %v1873, 1
      %v2036 = vrot.slane %v1883, 1
      %v2037 = vrot.slane %v1893, 1
      %v2038 = vrot.slane %v1903, 1
      %v2039 = vrot.slane %v1913, 1
      %v2040 = vrot.slane %v1923, 1
      %v2041 = vrot.slane %v1933, 1
      %v2042 = vrot.slane %v1943, 1
      %v2043 = vrot.slane %v1953, 1
      %v2044 = vrot.slane %v1963, 1
      %v2045 = vrot.slane %v1973, 1
      %v2046 = vrot.slane %v1983, 1
      %v2047 = vrot.slane %v1993, 1
      %v2048 = vrot.slane %v2003, 1
      %v2081 = vrot.slane %v1863, 7
      %v2082 = vrot.slane %v1868, 7
      %v2083 = vsel %vm327, %v2081, %v2082
      %v2084 = vrot.slane %v1853, 7
      %v2085 = vrot.slane %v1858, 7
      %v2086 = vsel %vm327, %v2084, %v2085
      %v2087 = vrot.slane %v1873, 7
      %v2088 = vrot.slane %v1878, 7
      %v2089 = vsel %vm327, %v2087, %v2088
      %v2090 = vrot.slane %v1883, 7
      %v2091 = vrot.slane %v1888, 7
      %v2092 = vsel %vm327, %v2090, %v2091
      %v2093 = vrot.slane %v1893, 7
      %v2094 = vrot.slane %v1898, 7
      %v2095 = vsel %vm327, %v2093, %v2094
      %v2096 = vrot.slane %v1903, 7
      %v2097 = vrot.slane %v1908, 7
      %v2098 = vsel %vm327, %v2096, %v2097
      %v2099 = vrot.slane %v1913, 7
      %v2100 = vrot.slane %v1918, 7
      %v2101 = vsel %vm327, %v2099, %v2100
      %v2102 = vrot.slane %v1923, 7
      %v2103 = vrot.slane %v1928, 7
      %v2104 = vsel %vm327, %v2102, %v2103
      %v2105 = vrot.slane %v1933, 7
      %v2106 = vrot.slane %v1938, 7
      %v2107 = vsel %vm327, %v2105, %v2106
      %v2108 = vrot.slane %v1943, 7
      %v2109 = vrot.slane %v1948, 7
      %v2110 = vsel %vm327, %v2108, %v2109
      %v2111 = vrot.slane %v1953, 7
      %v2112 = vrot.slane %v1958, 7
      %v2113 = vsel %vm327, %v2111, %v2112
      %v2114 = vrot.slane %v1963, 7
      %v2115 = vrot.slane %v1968, 7
      %v2116 = vsel %vm327, %v2114, %v2115
      %v2117 = vrot.slane %v1973, 7
      %v2118 = vrot.slane %v1978, 7
      %v2119 = vsel %vm327, %v2117, %v2118
      %v2120 = vrot.slane %v1983, 7
      %v2121 = vrot.slane %v1988, 7
      %v2122 = vsel %vm327, %v2120, %v2121
      %v2123 = vrot.slane %v1993, 7
      %v2124 = vrot.slane %v1998, 7
      %v2125 = vsel %vm327, %v2123, %v2124
      %v2126 = vrot.slane %v2003, 7
      %v2127 = vrot.slane %v2008, 7
      %v2128 = vsel %vm327, %v2126, %v2127
      %v2176 = vrot.slane %v1868, 5
      %v2177 = vrot.slane %v1858, 5
      %v2178 = vrot.slane %v1878, 5
      %v2179 = vrot.slane %v1888, 5
      %v2180 = vrot.slane %v1898, 5
      %v2181 = vrot.slane %v1908, 5
      %v2182 = vrot.slane %v1918, 5
      %v2183 = vrot.slane %v1928, 5
      %v2184 = vrot.slane %v1938, 5
      %v2185 = vrot.slane %v1948, 5
      %v2186 = vrot.slane %v1958, 5
      %v2187 = vrot.slane %v1968, 5
      %v2188 = vrot.slane %v1978, 5
      %v2189 = vrot.slane %v1988, 5
      %v2190 = vrot.slane %v1998, 5
      %v2191 = vrot.slane %v2008, 5
      %v2208 = vsel %vm327, %v2033, %v2081
      %v2209 = vsel %vm327, %v2034, %v2084
      %v2210 = vsel %vm327, %v2035, %v2087
      %v2211 = vsel %vm327, %v2036, %v2090
      %v2212 = vsel %vm327, %v2037, %v2093
      %v2213 = vsel %vm327, %v2038, %v2096
      %v2214 = vsel %vm327, %v2039, %v2099
      %v2215 = vsel %vm327, %v2040, %v2102
      %v2216 = vsel %vm327, %v2041, %v2105
      %v2217 = vsel %vm327, %v2042, %v2108
      %v2218 = vsel %vm327, %v2043, %v2111
      %v2219 = vsel %vm327, %v2044, %v2114
      %v2220 = vsel %vm327, %v2045, %v2117
      %v2221 = vsel %vm327, %v2046, %v2120
      %v2222 = vsel %vm327, %v2047, %v2123
      %v2223 = vsel %vm327, %v2048, %v2126
      %v2224 = vsel %vm327, %v2082, %v2176
      %v2225 = vsel %vm327, %v2085, %v2177
      %v2226 = vsel %vm327, %v2088, %v2178
      %v2227 = vsel %vm327, %v2091, %v2179
      %v2228 = vsel %vm327, %v2094, %v2180
      %v2229 = vsel %vm327, %v2097, %v2181
      %v2230 = vsel %vm327, %v2100, %v2182
      %v2231 = vsel %vm327, %v2103, %v2183
      %v2232 = vsel %vm327, %v2106, %v2184
      %v2233 = vsel %vm327, %v2109, %v2185
      %v2234 = vsel %vm327, %v2112, %v2186
      %v2235 = vsel %vm327, %v2115, %v2187
      %v2236 = vsel %vm327, %v2118, %v2188
      %v2237 = vsel %vm327, %v2121, %v2189
      %v2238 = vsel %vm327, %v2124, %v2190
      %v2239 = vsel %vm327, %v2127, %v2191
      %v2270 = vrot.slane %v2208, 1
      %v2271 = vrot.slane %v2083, 1
      %v2272 = vsel %vm517, %v2270, %v2271
      %v2273 = vrot.slane %v2224, 1
      %v2274 = vsel %vm517, %v2271, %v2273
      %v2275 = vrot.slane %v2209, 1
      %v2276 = vrot.slane %v2086, 1
      %v2277 = vsel %vm517, %v2275, %v2276
      %v2278 = vrot.slane %v2225, 1
      %v2279 = vsel %vm517, %v2276, %v2278
      %v2280 = vrot.slane %v2210, 1
      %v2281 = vrot.slane %v2089, 1
      %v2282 = vsel %vm517, %v2280, %v2281
      %v2283 = vrot.slane %v2226, 1
      %v2284 = vsel %vm517, %v2281, %v2283
      %v2285 = vrot.slane %v2211, 1
      %v2286 = vrot.slane %v2092, 1
      %v2287 = vsel %vm517, %v2285, %v2286
      %v2288 = vrot.slane %v2227, 1
      %v2289 = vsel %vm517, %v2286, %v2288
      %v2290 = vrot.slane %v2212, 1
      %v2291 = vrot.slane %v2095, 1
      %v2292 = vsel %vm517, %v2290, %v2291
      %v2293 = vrot.slane %v2228, 1
      %v2294 = vsel %vm517, %v2291, %v2293
      %v2295 = vrot.slane %v2213, 1
      %v2296 = vrot.slane %v2098, 1
      %v2297 = vsel %vm517, %v2295, %v2296
      %v2298 = vrot.slane %v2229, 1
      %v2299 = vsel %vm517, %v2296, %v2298
      %v2300 = vrot.slane %v2214, 1
      %v2301 = vrot.slane %v2101, 1
      %v2302 = vsel %vm517, %v2300, %v2301
      %v2303 = vrot.slane %v2230, 1
      %v2304 = vsel %vm517, %v2301, %v2303
      %v2305 = vrot.slane %v2215, 1
      %v2306 = vrot.slane %v2104, 1
      %v2307 = vsel %vm517, %v2305, %v2306
      %v2308 = vrot.slane %v2231, 1
      %v2309 = vsel %vm517, %v2306, %v2308
      %v2310 = vrot.slane %v2216, 1
      %v2311 = vrot.slane %v2107, 1
      %v2312 = vsel %vm517, %v2310, %v2311
      %v2313 = vrot.slane %v2232, 1
      %v2314 = vsel %vm517, %v2311, %v2313
      %v2315 = vrot.slane %v2217, 1
      %v2316 = vrot.slane %v2110, 1
      %v2317 = vsel %vm517, %v2315, %v2316
      %v2318 = vrot.slane %v2233, 1
      %v2319 = vsel %vm517, %v2316, %v2318
      %v2320 = vrot.slane %v2218, 1
      %v2321 = vrot.slane %v2113, 1
      %v2322 = vsel %vm517, %v2320, %v2321
      %v2323 = vrot.slane %v2234, 1
      %v2324 = vsel %vm517, %v2321, %v2323
      %v2325 = vrot.slane %v2219, 1
      %v2326 = vrot.slane %v2116, 1
      %v2327 = vsel %vm517, %v2325, %v2326
      %v2328 = vrot.slane %v2235, 1
      %v2329 = vsel %vm517, %v2326, %v2328
      %v2330 = vrot.slane %v2220, 1
      %v2331 = vrot.slane %v2119, 1
      %v2332 = vsel %vm517, %v2330, %v2331
      %v2333 = vrot.slane %v2236, 1
      %v2334 = vsel %vm517, %v2331, %v2333
      %v2335 = vrot.slane %v2221, 1
      %v2336 = vrot.slane %v2122, 1
      %v2337 = vsel %vm517, %v2335, %v2336
      %v2338 = vrot.slane %v2237, 1
      %v2339 = vsel %vm517, %v2336, %v2338
      %v2340 = vrot.slane %v2222, 1
      %v2341 = vrot.slane %v2125, 1
      %v2342 = vsel %vm517, %v2340, %v2341
      %v2343 = vrot.slane %v2238, 1
      %v2344 = vsel %vm517, %v2341, %v2343
      %2345 = vrot.lane.b32.xlu0 %v2272, 4
      %v2346 = vpop.permute.xlu0 %2345
      %2347 = vrot.lane.b32.xlu0 %v2274, 4
      %v2348 = vpop.permute.xlu0 %2347
      %2349 = vrot.lane.b32.xlu0 %v2277, 4
      %v2350 = vpop.permute.xlu0 %2349
      %2351 = vrot.lane.b32.xlu0 %v2279, 4
      %v2352 = vpop.permute.xlu0 %2351
      %2353 = vrot.lane.b32.xlu0 %v2282, 4
      %v2354 = vpop.permute.xlu0 %2353
      %2355 = vrot.lane.b32.xlu0 %v2284, 4
      %v2356 = vpop.permute.xlu0 %2355
      %2357 = vrot.lane.b32.xlu0 %v2287, 4
      %v2358 = vpop.permute.xlu0 %2357
      %2359 = vrot.lane.b32.xlu0 %v2289, 4
      %v2360 = vpop.permute.xlu0 %2359
      %2361 = vrot.lane.b32.xlu0 %v2292, 4
      %v2362 = vpop.permute.xlu0 %2361
      %2363 = vrot.lane.b32.xlu0 %v2294, 4
      %v2364 = vpop.permute.xlu0 %2363
      %2365 = vrot.lane.b32.xlu0 %v2297, 4
      %v2366 = vpop.permute.xlu0 %2365
      %2367 = vrot.lane.b32.xlu0 %v2299, 4
      %v2368 = vpop.permute.xlu0 %2367
      %2369 = vrot.lane.b32.xlu0 %v2302, 4
      %v2370 = vpop.permute.xlu0 %2369
      %2371 = vrot.lane.b32.xlu0 %v2304, 4
      %v2372 = vpop.permute.xlu0 %2371
      %2373 = vrot.lane.b32.xlu0 %v2307, 4
      %v2374 = vpop.permute.xlu0 %2373
      %2375 = vrot.lane.b32.xlu0 %v2309, 4
      %v2376 = vpop.permute.xlu0 %2375
      %2377 = vrot.lane.b32.xlu0 %v2312, 4
      %v2378 = vpop.permute.xlu0 %2377
      %2379 = vrot.lane.b32.xlu0 %v2314, 4
      %v2380 = vpop.permute.xlu0 %2379
      %2381 = vrot.lane.b32.xlu0 %v2317, 4
      %v2382 = vpop.permute.xlu0 %2381
      %2383 = vrot.lane.b32.xlu0 %v2319, 4
      %v2384 = vpop.permute.xlu0 %2383
      %2385 = vrot.lane.b32.xlu0 %v2322, 4
      %v2386 = vpop.permute.xlu0 %2385
      %2387 = vrot.lane.b32.xlu0 %v2324, 4
      %v2388 = vpop.permute.xlu0 %2387
      %2389 = vrot.lane.b32.xlu0 %v2327, 4
      %v2390 = vpop.permute.xlu0 %2389
      %2391 = vrot.lane.b32.xlu0 %v2329, 4
      %v2392 = vpop.permute.xlu0 %2391
      %2393 = vrot.lane.b32.xlu0 %v2332, 4
      %v2394 = vpop.permute.xlu0 %2393
      %2395 = vrot.lane.b32.xlu0 %v2334, 4
      %v2396 = vpop.permute.xlu0 %2395
      %2397 = vrot.lane.b32.xlu0 %v2337, 4
      %v2398 = vpop.permute.xlu0 %2397
      %2399 = vrot.lane.b32.xlu0 %v2339, 4
      %v2400 = vpop.permute.xlu0 %2399
      %2401 = vrot.lane.b32.xlu0 %v2342, 4
      %v2402 = vpop.permute.xlu0 %2401
      %2403 = vrot.lane.b32.xlu0 %v2344, 4
      %v2404 = vpop.permute.xlu0 %2403
      %v2435 = vrot.slane %v2208, 2
      %v2436 = vrot.slane %v2083, 2
      %v2437 = vsel %vm683, %v2435, %v2436
      %v2438 = vrot.slane %v2224, 2
      %v2439 = vsel %vm683, %v2436, %v2438
      %v2440 = vrot.slane %v2209, 2
      %v2441 = vrot.slane %v2086, 2
      %v2442 = vsel %vm683, %v2440, %v2441
      %v2443 = vrot.slane %v2225, 2
      %v2444 = vsel %vm683, %v2441, %v2443
      %v2445 = vrot.slane %v2210, 2
      %v2446 = vrot.slane %v2089, 2
      %v2447 = vsel %vm683, %v2445, %v2446
      %v2448 = vrot.slane %v2226, 2
      %v2449 = vsel %vm683, %v2446, %v2448
      %v2450 = vrot.slane %v2211, 2
      %v2451 = vrot.slane %v2092, 2
      %v2452 = vsel %vm683, %v2450, %v2451
      %v2453 = vrot.slane %v2227, 2
      %v2454 = vsel %vm683, %v2451, %v2453
      %v2455 = vrot.slane %v2212, 2
      %v2456 = vrot.slane %v2095, 2
      %v2457 = vsel %vm683, %v2455, %v2456
      %v2458 = vrot.slane %v2228, 2
      %v2459 = vsel %vm683, %v2456, %v2458
      %v2460 = vrot.slane %v2213, 2
      %v2461 = vrot.slane %v2098, 2
      %v2462 = vsel %vm683, %v2460, %v2461
      %v2463 = vrot.slane %v2229, 2
      %v2464 = vsel %vm683, %v2461, %v2463
      %v2465 = vrot.slane %v2214, 2
      %v2466 = vrot.slane %v2101, 2
      %v2467 = vsel %vm683, %v2465, %v2466
      %v2468 = vrot.slane %v2230, 2
      %v2469 = vsel %vm683, %v2466, %v2468
      %v2470 = vrot.slane %v2215, 2
      %v2471 = vrot.slane %v2104, 2
      %v2472 = vsel %vm683, %v2470, %v2471
      %v2473 = vrot.slane %v2231, 2
      %v2474 = vsel %vm683, %v2471, %v2473
      %v2475 = vrot.slane %v2216, 2
      %v2476 = vrot.slane %v2107, 2
      %v2477 = vsel %vm683, %v2475, %v2476
      %v2478 = vrot.slane %v2232, 2
      %v2479 = vsel %vm683, %v2476, %v2478
      %v2480 = vrot.slane %v2217, 2
      %v2481 = vrot.slane %v2110, 2
      %v2482 = vsel %vm683, %v2480, %v2481
      %v2483 = vrot.slane %v2233, 2
      %v2484 = vsel %vm683, %v2481, %v2483
      %v2485 = vrot.slane %v2218, 2
      %v2486 = vrot.slane %v2113, 2
      %v2487 = vsel %vm683, %v2485, %v2486
      %v2488 = vrot.slane %v2234, 2
      %v2489 = vsel %vm683, %v2486, %v2488
      %v2490 = vrot.slane %v2219, 2
      %v2491 = vrot.slane %v2116, 2
      %v2492 = vsel %vm683, %v2490, %v2491
      %v2493 = vrot.slane %v2235, 2
      %v2494 = vsel %vm683, %v2491, %v2493
      %v2495 = vrot.slane %v2220, 2
      %v2496 = vrot.slane %v2119, 2
      %v2497 = vsel %vm683, %v2495, %v2496
      %v2498 = vrot.slane %v2236, 2
      %v2499 = vsel %vm683, %v2496, %v2498
      %v2500 = vrot.slane %v2221, 2
      %v2501 = vrot.slane %v2122, 2
      %v2502 = vsel %vm683, %v2500, %v2501
      %v2503 = vrot.slane %v2237, 2
      %v2504 = vsel %vm683, %v2501, %v2503
      %v2505 = vrot.slane %v2222, 2
      %v2506 = vrot.slane %v2125, 2
      %v2507 = vsel %vm683, %v2505, %v2506
      %v2508 = vrot.slane %v2238, 2
      %v2509 = vsel %vm683, %v2506, %v2508
      %2510 = vrot.lane.b32.xlu0 %v2437, 8
      %v2511 = vpop.permute.xlu0 %2510
      %2512 = vrot.lane.b32.xlu0 %v2439, 8
      %v2513 = vpop.permute.xlu0 %2512
      %2514 = vrot.lane.b32.xlu0 %v2442, 8
      %v2515 = vpop.permute.xlu0 %2514
      %2516 = vrot.lane.b32.xlu0 %v2444, 8
      %v2517 = vpop.permute.xlu0 %2516
      %2518 = vrot.lane.b32.xlu0 %v2447, 8
      %v2519 = vpop.permute.xlu0 %2518
      %2520 = vrot.lane.b32.xlu0 %v2449, 8
      %v2521 = vpop.permute.xlu0 %2520
      %2522 = vrot.lane.b32.xlu0 %v2452, 8
      %v2523 = vpop.permute.xlu0 %2522
      %2524 = vrot.lane.b32.xlu0 %v2454, 8
      %v2525 = vpop.permute.xlu0 %2524
      %2526 = vrot.lane.b32.xlu0 %v2457, 8
      %v2527 = vpop.permute.xlu0 %2526
      %2528 = vrot.lane.b32.xlu0 %v2459, 8
      %v2529 = vpop.permute.xlu0 %2528
      %2530 = vrot.lane.b32.xlu0 %v2462, 8
      %v2531 = vpop.permute.xlu0 %2530
      %2532 = vrot.lane.b32.xlu0 %v2464, 8
      %v2533 = vpop.permute.xlu0 %2532
      %2534 = vrot.lane.b32.xlu0 %v2467, 8
      %v2535 = vpop.permute.xlu0 %2534
      %2536 = vrot.lane.b32.xlu0 %v2469, 8
      %v2537 = vpop.permute.xlu0 %2536
      %2538 = vrot.lane.b32.xlu0 %v2472, 8
      %v2539 = vpop.permute.xlu0 %2538
      %2540 = vrot.lane.b32.xlu0 %v2474, 8
      %v2541 = vpop.permute.xlu0 %2540
      %2542 = vrot.lane.b32.xlu0 %v2477, 8
      %v2543 = vpop.permute.xlu0 %2542
      %2544 = vrot.lane.b32.xlu0 %v2479, 8
      %v2545 = vpop.permute.xlu0 %2544
      %2546 = vrot.lane.b32.xlu0 %v2482, 8
      %v2547 = vpop.permute.xlu0 %2546
      %2548 = vrot.lane.b32.xlu0 %v2484, 8
      %v2549 = vpop.permute.xlu0 %2548
      %2550 = vrot.lane.b32.xlu0 %v2487, 8
      %v2551 = vpop.permute.xlu0 %2550
      %2552 = vrot.lane.b32.xlu0 %v2489, 8
      %v2553 = vpop.permute.xlu0 %2552
      %2554 = vrot.lane.b32.xlu0 %v2492, 8
      %v2555 = vpop.permute.xlu0 %2554
      %2556 = vrot.lane.b32.xlu0 %v2494, 8
      %v2557 = vpop.permute.xlu0 %2556
      %2558 = vrot.lane.b32.xlu0 %v2497, 8
      %v2559 = vpop.permute.xlu0 %2558
      %2560 = vrot.lane.b32.xlu0 %v2499, 8
      %v2561 = vpop.permute.xlu0 %2560
      %2562 = vrot.lane.b32.xlu0 %v2502, 8
      %v2563 = vpop.permute.xlu0 %2562
      %2564 = vrot.lane.b32.xlu0 %v2504, 8
      %v2565 = vpop.permute.xlu0 %2564
      %2566 = vrot.lane.b32.xlu0 %v2507, 8
      %v2567 = vpop.permute.xlu0 %2566
      %2568 = vrot.lane.b32.xlu0 %v2509, 8
      %v2569 = vpop.permute.xlu0 %2568
      %2601 = vrot.lane.b32.xlu0 %v2209, 12
      %v2602 = vpop.permute.xlu0 %2601
      %2603 = vrot.lane.b32.xlu0 %v2086, 12
      %v2604 = vpop.permute.xlu0 %2603
      %2605 = vrot.lane.b32.xlu0 %v2208, 12
      %v2606 = vpop.permute.xlu0 %2605
      %2607 = vrot.lane.b32.xlu0 %v2083, 12
      %v2608 = vpop.permute.xlu0 %2607
      %2609 = vrot.lane.b32.xlu0 %v2210, 12
      %v2610 = vpop.permute.xlu0 %2609
      %2611 = vrot.lane.b32.xlu0 %v2089, 12
      %v2612 = vpop.permute.xlu0 %2611
      %2613 = vrot.lane.b32.xlu0 %v2211, 12
      %v2614 = vpop.permute.xlu0 %2613
      %2615 = vrot.lane.b32.xlu0 %v2092, 12
      %v2616 = vpop.permute.xlu0 %2615
      %2617 = vrot.lane.b32.xlu0 %v2212, 12
      %v2618 = vpop.permute.xlu0 %2617
      %2619 = vrot.lane.b32.xlu0 %v2095, 12
      %v2620 = vpop.permute.xlu0 %2619
      %2621 = vrot.lane.b32.xlu0 %v2213, 12
      %v2622 = vpop.permute.xlu0 %2621
      %2623 = vrot.lane.b32.xlu0 %v2098, 12
      %v2624 = vpop.permute.xlu0 %2623
      %2625 = vrot.lane.b32.xlu0 %v2214, 12
      %v2626 = vpop.permute.xlu0 %2625
      %2627 = vrot.lane.b32.xlu0 %v2101, 12
      %v2628 = vpop.permute.xlu0 %2627
      %2629 = vrot.lane.b32.xlu0 %v2215, 12
      %v2630 = vpop.permute.xlu0 %2629
      %2631 = vrot.lane.b32.xlu0 %v2104, 12
      %v2632 = vpop.permute.xlu0 %2631
      %2633 = vrot.lane.b32.xlu0 %v2216, 12
      %v2634 = vpop.permute.xlu0 %2633
      %2635 = vrot.lane.b32.xlu0 %v2107, 12
      %v2636 = vpop.permute.xlu0 %2635
      %2637 = vrot.lane.b32.xlu0 %v2217, 12
      %v2638 = vpop.permute.xlu0 %2637
      %2639 = vrot.lane.b32.xlu0 %v2110, 12
      %v2640 = vpop.permute.xlu0 %2639
      %2641 = vrot.lane.b32.xlu0 %v2218, 12
      %v2642 = vpop.permute.xlu0 %2641
      %2643 = vrot.lane.b32.xlu0 %v2113, 12
      %v2644 = vpop.permute.xlu0 %2643
      %2645 = vrot.lane.b32.xlu0 %v2219, 12
      %v2646 = vpop.permute.xlu0 %2645
      %2647 = vrot.lane.b32.xlu0 %v2116, 12
      %v2648 = vpop.permute.xlu0 %2647
      %2649 = vrot.lane.b32.xlu0 %v2220, 12
      %v2650 = vpop.permute.xlu0 %2649
      %2651 = vrot.lane.b32.xlu0 %v2119, 12
      %v2652 = vpop.permute.xlu0 %2651
      %2653 = vrot.lane.b32.xlu0 %v2221, 12
      %v2654 = vpop.permute.xlu0 %2653
      %2655 = vrot.lane.b32.xlu0 %v2122, 12
      %v2656 = vpop.permute.xlu0 %2655
      %2657 = vrot.lane.b32.xlu0 %v2222, 12
      %v2658 = vpop.permute.xlu0 %2657
      %2659 = vrot.lane.b32.xlu0 %v2125, 12
      %v2660 = vpop.permute.xlu0 %2659
      %2661 = vrot.lane.b32.xlu0 %v2223, 12
      %v2662 = vpop.permute.xlu0 %2661
      %2663 = vrot.lane.b32.xlu0 %v2128, 12
      %v2664 = vpop.permute.xlu0 %2663
      %v2698 = vrot.slane %v2223, 1
      %v2699 = vrot.slane %v2128, 1
      %v2700 = vsel %vm517, %v2698, %v2699
      %v2701 = vrot.slane %v2239, 1
      %v2702 = vsel %vm517, %v2699, %v2701
      %2703 = vrot.lane.b32.xlu0 %v2277, 16
      %v2704 = vpop.permute.xlu0 %2703
      %2705 = vrot.lane.b32.xlu0 %v2279, 16
      %v2706 = vpop.permute.xlu0 %2705
      %2707 = vrot.lane.b32.xlu0 %v2272, 16
      %v2708 = vpop.permute.xlu0 %2707
      %2709 = vrot.lane.b32.xlu0 %v2274, 16
      %v2710 = vpop.permute.xlu0 %2709
      %2711 = vrot.lane.b32.xlu0 %v2282, 16
      %v2712 = vpop.permute.xlu0 %2711
      %2713 = vrot.lane.b32.xlu0 %v2284, 16
      %v2714 = vpop.permute.xlu0 %2713
      %2715 = vrot.lane.b32.xlu0 %v2287, 16
      %v2716 = vpop.permute.xlu0 %2715
      %2717 = vrot.lane.b32.xlu0 %v2289, 16
      %v2718 = vpop.permute.xlu0 %2717
      %2719 = vrot.lane.b32.xlu0 %v2292, 16
      %v2720 = vpop.permute.xlu0 %2719
      %2721 = vrot.lane.b32.xlu0 %v2294, 16
      %v2722 = vpop.permute.xlu0 %2721
      %2723 = vrot.lane.b32.xlu0 %v2297, 16
      %v2724 = vpop.permute.xlu0 %2723
      %2725 = vrot.lane.b32.xlu0 %v2299, 16
      %v2726 = vpop.permute.xlu0 %2725
      %2727 = vrot.lane.b32.xlu0 %v2302, 16
      %v2728 = vpop.permute.xlu0 %2727
      %2729 = vrot.lane.b32.xlu0 %v2304, 16
      %v2730 = vpop.permute.xlu0 %2729
      %2731 = vrot.lane.b32.xlu0 %v2307, 16
      %v2732 = vpop.permute.xlu0 %2731
      %2733 = vrot.lane.b32.xlu0 %v2309, 16
      %v2734 = vpop.permute.xlu0 %2733
      %2735 = vrot.lane.b32.xlu0 %v2312, 16
      %v2736 = vpop.permute.xlu0 %2735
      %2737 = vrot.lane.b32.xlu0 %v2314, 16
      %v2738 = vpop.permute.xlu0 %2737
      %2739 = vrot.lane.b32.xlu0 %v2317, 16
      %v2740 = vpop.permute.xlu0 %2739
      %2741 = vrot.lane.b32.xlu0 %v2319, 16
      %v2742 = vpop.permute.xlu0 %2741
      %2743 = vrot.lane.b32.xlu0 %v2322, 16
      %v2744 = vpop.permute.xlu0 %2743
      %2745 = vrot.lane.b32.xlu0 %v2324, 16
      %v2746 = vpop.permute.xlu0 %2745
      %2747 = vrot.lane.b32.xlu0 %v2327, 16
      %v2748 = vpop.permute.xlu0 %2747
      %2749 = vrot.lane.b32.xlu0 %v2329, 16
      %v2750 = vpop.permute.xlu0 %2749
      %2751 = vrot.lane.b32.xlu0 %v2332, 16
      %v2752 = vpop.permute.xlu0 %2751
      %2753 = vrot.lane.b32.xlu0 %v2334, 16
      %v2754 = vpop.permute.xlu0 %2753
      %2755 = vrot.lane.b32.xlu0 %v2337, 16
      %v2756 = vpop.permute.xlu0 %2755
      %2757 = vrot.lane.b32.xlu0 %v2339, 16
      %v2758 = vpop.permute.xlu0 %2757
      %2759 = vrot.lane.b32.xlu0 %v2342, 16
      %v2760 = vpop.permute.xlu0 %2759
      %2761 = vrot.lane.b32.xlu0 %v2344, 16
      %v2762 = vpop.permute.xlu0 %2761
      %2763 = vrot.lane.b32.xlu0 %v2700, 16
      %v2764 = vpop.permute.xlu0 %2763
      %2765 = vrot.lane.b32.xlu0 %v2702, 16
      %v2766 = vpop.permute.xlu0 %2765
      %v2799 = vrot.slane %v2223, 2
      %v2800 = vrot.slane %v2128, 2
      %v2801 = vsel %vm683, %v2799, %v2800
      %v2802 = vrot.slane %v2239, 2
      %v2803 = vsel %vm683, %v2800, %v2802
      %2804 = vrot.lane.b32.xlu0 %v2442, 20
      %v2805 = vpop.permute.xlu0 %2804
      %2806 = vrot.lane.b32.xlu0 %v2444, 20
      %v2807 = vpop.permute.xlu0 %2806
      %2808 = vrot.lane.b32.xlu0 %v2437, 20
      %v2809 = vpop.permute.xlu0 %2808
      %2810 = vrot.lane.b32.xlu0 %v2439, 20
      %v2811 = vpop.permute.xlu0 %2810
      %2812 = vrot.lane.b32.xlu0 %v2447, 20
      %v2813 = vpop.permute.xlu0 %2812
      %2814 = vrot.lane.b32.xlu0 %v2449, 20
      %v2815 = vpop.permute.xlu0 %2814
      %2816 = vrot.lane.b32.xlu0 %v2452, 20
      %v2817 = vpop.permute.xlu0 %2816
      %2818 = vrot.lane.b32.xlu0 %v2454, 20
      %v2819 = vpop.permute.xlu0 %2818
      %2820 = vrot.lane.b32.xlu0 %v2457, 20
      %v2821 = vpop.permute.xlu0 %2820
      %2822 = vrot.lane.b32.xlu0 %v2459, 20
      %v2823 = vpop.permute.xlu0 %2822
      %2824 = vrot.lane.b32.xlu0 %v2462, 20
      %v2825 = vpop.permute.xlu0 %2824
      %2826 = vrot.lane.b32.xlu0 %v2464, 20
      %v2827 = vpop.permute.xlu0 %2826
      %2828 = vrot.lane.b32.xlu0 %v2467, 20
      %v2829 = vpop.permute.xlu0 %2828
      %2830 = vrot.lane.b32.xlu0 %v2469, 20
      %v2831 = vpop.permute.xlu0 %2830
      %2832 = vrot.lane.b32.xlu0 %v2472, 20
      %v2833 = vpop.permute.xlu0 %2832
      %2834 = vrot.lane.b32.xlu0 %v2474, 20
      %v2835 = vpop.permute.xlu0 %2834
      %2836 = vrot.lane.b32.xlu0 %v2477, 20
      %v2837 = vpop.permute.xlu0 %2836
      %2838 = vrot.lane.b32.xlu0 %v2479, 20
      %v2839 = vpop.permute.xlu0 %2838
      %2840 = vrot.lane.b32.xlu0 %v2482, 20
      %v2841 = vpop.permute.xlu0 %2840
      %2842 = vrot.lane.b32.xlu0 %v2484, 20
      %v2843 = vpop.permute.xlu0 %2842
      %2844 = vrot.lane.b32.xlu0 %v2487, 20
      %v2845 = vpop.permute.xlu0 %2844
      %2846 = vrot.lane.b32.xlu0 %v2489, 20
      %v2847 = vpop.permute.xlu0 %2846
      %2848 = vrot.lane.b32.xlu0 %v2492, 20
      %v2849 = vpop.permute.xlu0 %2848
      %2850 = vrot.lane.b32.xlu0 %v2494, 20
      %v2851 = vpop.permute.xlu0 %2850
      %2852 = vrot.lane.b32.xlu0 %v2497, 20
      %v2853 = vpop.permute.xlu0 %2852
      %2854 = vrot.lane.b32.xlu0 %v2499, 20
      %v2855 = vpop.permute.xlu0 %2854
      %2856 = vrot.lane.b32.xlu0 %v2502, 20
      %v2857 = vpop.permute.xlu0 %2856
      %2858 = vrot.lane.b32.xlu0 %v2504, 20
      %v2859 = vpop.permute.xlu0 %2858
      %2860 = vrot.lane.b32.xlu0 %v2507, 20
      %v2861 = vpop.permute.xlu0 %2860
      %2862 = vrot.lane.b32.xlu0 %v2509, 20
      %v2863 = vpop.permute.xlu0 %2862
      %2864 = vrot.lane.b32.xlu0 %v2801, 20
      %v2865 = vpop.permute.xlu0 %2864
      %2866 = vrot.lane.b32.xlu0 %v2803, 20
      %v2867 = vpop.permute.xlu0 %2866
      %2900 = vrot.lane.b32.xlu0 %v2208, 24
      %v2901 = vpop.permute.xlu0 %2900
      %2902 = vrot.lane.b32.xlu0 %v2083, 24
      %v2903 = vpop.permute.xlu0 %2902
      %2904 = vrot.lane.b32.xlu0 %v2210, 24
      %v2905 = vpop.permute.xlu0 %2904
      %2906 = vrot.lane.b32.xlu0 %v2089, 24
      %v2907 = vpop.permute.xlu0 %2906
      %2908 = vrot.lane.b32.xlu0 %v2211, 24
      %v2909 = vpop.permute.xlu0 %2908
      %2910 = vrot.lane.b32.xlu0 %v2092, 24
      %v2911 = vpop.permute.xlu0 %2910
      %2912 = vrot.lane.b32.xlu0 %v2212, 24
      %v2913 = vpop.permute.xlu0 %2912
      %2914 = vrot.lane.b32.xlu0 %v2095, 24
      %v2915 = vpop.permute.xlu0 %2914
      %2916 = vrot.lane.b32.xlu0 %v2213, 24
      %v2917 = vpop.permute.xlu0 %2916
      %2918 = vrot.lane.b32.xlu0 %v2098, 24
      %v2919 = vpop.permute.xlu0 %2918
      %2920 = vrot.lane.b32.xlu0 %v2214, 24
      %v2921 = vpop.permute.xlu0 %2920
      %2922 = vrot.lane.b32.xlu0 %v2101, 24
      %v2923 = vpop.permute.xlu0 %2922
      %2924 = vrot.lane.b32.xlu0 %v2215, 24
      %v2925 = vpop.permute.xlu0 %2924
      %2926 = vrot.lane.b32.xlu0 %v2104, 24
      %v2927 = vpop.permute.xlu0 %2926
      %2928 = vrot.lane.b32.xlu0 %v2216, 24
      %v2929 = vpop.permute.xlu0 %2928
      %2930 = vrot.lane.b32.xlu0 %v2107, 24
      %v2931 = vpop.permute.xlu0 %2930
      %2932 = vrot.lane.b32.xlu0 %v2217, 24
      %v2933 = vpop.permute.xlu0 %2932
      %2934 = vrot.lane.b32.xlu0 %v2110, 24
      %v2935 = vpop.permute.xlu0 %2934
      %2936 = vrot.lane.b32.xlu0 %v2218, 24
      %v2937 = vpop.permute.xlu0 %2936
      %2938 = vrot.lane.b32.xlu0 %v2113, 24
      %v2939 = vpop.permute.xlu0 %2938
      %2940 = vrot.lane.b32.xlu0 %v2219, 24
      %v2941 = vpop.permute.xlu0 %2940
      %2942 = vrot.lane.b32.xlu0 %v2116, 24
      %v2943 = vpop.permute.xlu0 %2942
      %2944 = vrot.lane.b32.xlu0 %v2220, 24
      %v2945 = vpop.permute.xlu0 %2944
      %2946 = vrot.lane.b32.xlu0 %v2119, 24
      %v2947 = vpop.permute.xlu0 %2946
      %2948 = vrot.lane.b32.xlu0 %v2221, 24
      %v2949 = vpop.permute.xlu0 %2948
      %2950 = vrot.lane.b32.xlu0 %v2122, 24
      %v2951 = vpop.permute.xlu0 %2950
      %2952 = vrot.lane.b32.xlu0 %v2222, 24
      %v2953 = vpop.permute.xlu0 %2952
      %2954 = vrot.lane.b32.xlu0 %v2125, 24
      %v2955 = vpop.permute.xlu0 %2954
      %2956 = vrot.lane.b32.xlu0 %v2223, 24
      %v2957 = vpop.permute.xlu0 %2956
      %2958 = vrot.lane.b32.xlu0 %v2128, 24
      %v2959 = vpop.permute.xlu0 %2958
      %2990 = vrot.lane.b32.xlu0 %v2272, 28
      %v2991 = vpop.permute.xlu0 %2990
      %2992 = vrot.lane.b32.xlu0 %v2274, 28
      %v2993 = vpop.permute.xlu0 %2992
      %2994 = vrot.lane.b32.xlu0 %v2282, 28
      %v2995 = vpop.permute.xlu0 %2994
      %2996 = vrot.lane.b32.xlu0 %v2284, 28
      %v2997 = vpop.permute.xlu0 %2996
      %2998 = vrot.lane.b32.xlu0 %v2287, 28
      %v2999 = vpop.permute.xlu0 %2998
      %3000 = vrot.lane.b32.xlu0 %v2289, 28
      %v3001 = vpop.permute.xlu0 %3000
      %3002 = vrot.lane.b32.xlu0 %v2292, 28
      %v3003 = vpop.permute.xlu0 %3002
      %3004 = vrot.lane.b32.xlu0 %v2294, 28
      %v3005 = vpop.permute.xlu0 %3004
      %3006 = vrot.lane.b32.xlu0 %v2297, 28
      %v3007 = vpop.permute.xlu0 %3006
      %3008 = vrot.lane.b32.xlu0 %v2299, 28
      %v3009 = vpop.permute.xlu0 %3008
      %3010 = vrot.lane.b32.xlu0 %v2302, 28
      %v3011 = vpop.permute.xlu0 %3010
      %3012 = vrot.lane.b32.xlu0 %v2304, 28
      %v3013 = vpop.permute.xlu0 %3012
      %3014 = vrot.lane.b32.xlu0 %v2307, 28
      %v3015 = vpop.permute.xlu0 %3014
      %3016 = vrot.lane.b32.xlu0 %v2309, 28
      %v3017 = vpop.permute.xlu0 %3016
      %3018 = vrot.lane.b32.xlu0 %v2312, 28
      %v3019 = vpop.permute.xlu0 %3018
      %3020 = vrot.lane.b32.xlu0 %v2314, 28
      %v3021 = vpop.permute.xlu0 %3020
      %3022 = vrot.lane.b32.xlu0 %v2317, 28
      %v3023 = vpop.permute.xlu0 %3022
      %3024 = vrot.lane.b32.xlu0 %v2319, 28
      %v3025 = vpop.permute.xlu0 %3024
      %3026 = vrot.lane.b32.xlu0 %v2322, 28
      %v3027 = vpop.permute.xlu0 %3026
      %3028 = vrot.lane.b32.xlu0 %v2324, 28
      %v3029 = vpop.permute.xlu0 %3028
      %3030 = vrot.lane.b32.xlu0 %v2327, 28
      %v3031 = vpop.permute.xlu0 %3030
      %3032 = vrot.lane.b32.xlu0 %v2329, 28
      %v3033 = vpop.permute.xlu0 %3032
      %3034 = vrot.lane.b32.xlu0 %v2332, 28
      %v3035 = vpop.permute.xlu0 %3034
      %3036 = vrot.lane.b32.xlu0 %v2334, 28
      %v3037 = vpop.permute.xlu0 %3036
      %3038 = vrot.lane.b32.xlu0 %v2337, 28
      %v3039 = vpop.permute.xlu0 %3038
      %3040 = vrot.lane.b32.xlu0 %v2339, 28
      %v3041 = vpop.permute.xlu0 %3040
      %3042 = vrot.lane.b32.xlu0 %v2342, 28
      %v3043 = vpop.permute.xlu0 %3042
      %3044 = vrot.lane.b32.xlu0 %v2344, 28
      %v3045 = vpop.permute.xlu0 %3044
      %3046 = vrot.lane.b32.xlu0 %v2700, 28
      %v3047 = vpop.permute.xlu0 %3046
      %3048 = vrot.lane.b32.xlu0 %v2702, 28
      %v3049 = vpop.permute.xlu0 %3048
      %3080 = vrot.lane.b32.xlu0 %v2437, 32
      %v3081 = vpop.permute.xlu0 %3080
      %3082 = vrot.lane.b32.xlu0 %v2439, 32
      %v3083 = vpop.permute.xlu0 %3082
      %3084 = vrot.lane.b32.xlu0 %v2447, 32
      %v3085 = vpop.permute.xlu0 %3084
      %3086 = vrot.lane.b32.xlu0 %v2449, 32
      %v3087 = vpop.permute.xlu0 %3086
      %3088 = vrot.lane.b32.xlu0 %v2452, 32
      %v3089 = vpop.permute.xlu0 %3088
      %3090 = vrot.lane.b32.xlu0 %v2454, 32
      %v3091 = vpop.permute.xlu0 %3090
      %3092 = vrot.lane.b32.xlu0 %v2457, 32
      %v3093 = vpop.permute.xlu0 %3092
      %3094 = vrot.lane.b32.xlu0 %v2459, 32
      %v3095 = vpop.permute.xlu0 %3094
      %3096 = vrot.lane.b32.xlu0 %v2462, 32
      %v3097 = vpop.permute.xlu0 %3096
      %3098 = vrot.lane.b32.xlu0 %v2464, 32
      %v3099 = vpop.permute.xlu0 %3098
      %3100 = vrot.lane.b32.xlu0 %v2467, 32
      %v3101 = vpop.permute.xlu0 %3100
      %3102 = vrot.lane.b32.xlu0 %v2469, 32
      %v3103 = vpop.permute.xlu0 %3102
      %3104 = vrot.lane.b32.xlu0 %v2472, 32
      %v3105 = vpop.permute.xlu0 %3104
      %3106 = vrot.lane.b32.xlu0 %v2474, 32
      %v3107 = vpop.permute.xlu0 %3106
      %3108 = vrot.lane.b32.xlu0 %v2477, 32
      %v3109 = vpop.permute.xlu0 %3108
      %3110 = vrot.lane.b32.xlu0 %v2479, 32
      %v3111 = vpop.permute.xlu0 %3110
      %3112 = vrot.lane.b32.xlu0 %v2482, 32
      %v3113 = vpop.permute.xlu0 %3112
      %3114 = vrot.lane.b32.xlu0 %v2484, 32
      %v3115 = vpop.permute.xlu0 %3114
      %3116 = vrot.lane.b32.xlu0 %v2487, 32
      %v3117 = vpop.permute.xlu0 %3116
      %3118 = vrot.lane.b32.xlu0 %v2489, 32
      %v3119 = vpop.permute.xlu0 %3118
      %3120 = vrot.lane.b32.xlu0 %v2492, 32
      %v3121 = vpop.permute.xlu0 %3120
      %3122 = vrot.lane.b32.xlu0 %v2494, 32
      %v3123 = vpop.permute.xlu0 %3122
      %3124 = vrot.lane.b32.xlu0 %v2497, 32
      %v3125 = vpop.permute.xlu0 %3124
      %3126 = vrot.lane.b32.xlu0 %v2499, 32
      %v3127 = vpop.permute.xlu0 %3126
      %3128 = vrot.lane.b32.xlu0 %v2502, 32
      %v3129 = vpop.permute.xlu0 %3128
      %3130 = vrot.lane.b32.xlu0 %v2504, 32
      %v3131 = vpop.permute.xlu0 %3130
      %3132 = vrot.lane.b32.xlu0 %v2507, 32
      %v3133 = vpop.permute.xlu0 %3132
      %3134 = vrot.lane.b32.xlu0 %v2509, 32
      %v3135 = vpop.permute.xlu0 %3134
      %3136 = vrot.lane.b32.xlu0 %v2801, 32
      %v3137 = vpop.permute.xlu0 %3136
      %3138 = vrot.lane.b32.xlu0 %v2803, 32
      %v3139 = vpop.permute.xlu0 %3138
      %v3170 = vsel %vm1419, %v2208, %v2346
      %v3171 = vsel %vm1419, %v2083, %v2348
      %v3172 = vsel %vm1419, %v2209, %v2350
      %v3173 = vsel %vm1419, %v2086, %v2352
      %v3174 = vsel %vm1419, %v2210, %v2354
      %v3175 = vsel %vm1419, %v2089, %v2356
      %v3176 = vsel %vm1419, %v2211, %v2358
      %v3177 = vsel %vm1419, %v2092, %v2360
      %v3178 = vsel %vm1419, %v2212, %v2362
      %v3179 = vsel %vm1419, %v2095, %v2364
      %v3180 = vsel %vm1419, %v2213, %v2366
      %v3181 = vsel %vm1419, %v2098, %v2368
      %v3182 = vsel %vm1419, %v2214, %v2370
      %v3183 = vsel %vm1419, %v2101, %v2372
      %v3184 = vsel %vm1419, %v2215, %v2374
      %v3185 = vsel %vm1419, %v2104, %v2376
      %v3186 = vsel %vm1419, %v2216, %v2378
      %v3187 = vsel %vm1419, %v2107, %v2380
      %v3188 = vsel %vm1419, %v2217, %v2382
      %v3189 = vsel %vm1419, %v2110, %v2384
      %v3190 = vsel %vm1419, %v2218, %v2386
      %v3191 = vsel %vm1419, %v2113, %v2388
      %v3192 = vsel %vm1419, %v2219, %v2390
      %v3193 = vsel %vm1419, %v2116, %v2392
      %v3194 = vsel %vm1419, %v2220, %v2394
      %v3195 = vsel %vm1419, %v2119, %v2396
      %v3196 = vsel %vm1419, %v2221, %v2398
      %v3197 = vsel %vm1419, %v2122, %v2400
      %v3198 = vsel %vm1419, %v2222, %v2402
      %v3199 = vsel %vm1419, %v2125, %v2404
      %v3200 = vsel %vm1450, %v3170, %v2511
      %v3201 = vsel %vm1450, %v3171, %v2513
      %v3202 = vsel %vm1450, %v3172, %v2515
      %v3203 = vsel %vm1450, %v3173, %v2517
      %v3204 = vsel %vm1450, %v3174, %v2519
      %v3205 = vsel %vm1450, %v3175, %v2521
      %v3206 = vsel %vm1450, %v3176, %v2523
      %v3207 = vsel %vm1450, %v3177, %v2525
      %v3208 = vsel %vm1450, %v3178, %v2527
      %v3209 = vsel %vm1450, %v3179, %v2529
      %v3210 = vsel %vm1450, %v3180, %v2531
      %v3211 = vsel %vm1450, %v3181, %v2533
      %v3212 = vsel %vm1450, %v3182, %v2535
      %v3213 = vsel %vm1450, %v3183, %v2537
      %v3214 = vsel %vm1450, %v3184, %v2539
      %v3215 = vsel %vm1450, %v3185, %v2541
      %v3216 = vsel %vm1450, %v3186, %v2543
      %v3217 = vsel %vm1450, %v3187, %v2545
      %v3218 = vsel %vm1450, %v3188, %v2547
      %v3219 = vsel %vm1450, %v3189, %v2549
      %v3220 = vsel %vm1450, %v3190, %v2551
      %v3221 = vsel %vm1450, %v3191, %v2553
      %v3222 = vsel %vm1450, %v3192, %v2555
      %v3223 = vsel %vm1450, %v3193, %v2557
      %v3224 = vsel %vm1450, %v3194, %v2559
      %v3225 = vsel %vm1450, %v3195, %v2561
      %v3226 = vsel %vm1450, %v3196, %v2563
      %v3227 = vsel %vm1450, %v3197, %v2565
      %v3228 = vsel %vm1450, %v3198, %v2567
      %v3229 = vsel %vm1450, %v3199, %v2569
      %v3230 = vsel %vm1481, %v3200, %v2602
      %v3231 = vsel %vm1481, %v3201, %v2604
      %v3232 = vsel %vm1481, %v3202, %v2606
      %v3233 = vsel %vm1481, %v3203, %v2608
      %v3234 = vsel %vm1481, %v3200, %v2610
      %v3235 = vsel %vm1481, %v3201, %v2612
      %v3236 = vsel %vm1481, %v3204, %v2614
      %v3237 = vsel %vm1481, %v3205, %v2616
      %v3238 = vsel %vm1481, %v3206, %v2618
      %v3239 = vsel %vm1481, %v3207, %v2620
      %v3240 = vsel %vm1481, %v3208, %v2622
      %v3241 = vsel %vm1481, %v3209, %v2624
      %v3242 = vsel %vm1481, %v3210, %v2626
      %v3243 = vsel %vm1481, %v3211, %v2628
      %v3244 = vsel %vm1481, %v3212, %v2630
      %v3245 = vsel %vm1481, %v3213, %v2632
      %v3246 = vsel %vm1481, %v3214, %v2634
      %v3247 = vsel %vm1481, %v3215, %v2636
      %v3248 = vsel %vm1481, %v3216, %v2638
      %v3249 = vsel %vm1481, %v3217, %v2640
      %v3250 = vsel %vm1481, %v3218, %v2642
      %v3251 = vsel %vm1481, %v3219, %v2644
      %v3252 = vsel %vm1481, %v3220, %v2646
      %v3253 = vsel %vm1481, %v3221, %v2648
      %v3254 = vsel %vm1481, %v3222, %v2650
      %v3255 = vsel %vm1481, %v3223, %v2652
      %v3256 = vsel %vm1481, %v3224, %v2654
      %v3257 = vsel %vm1481, %v3225, %v2656
      %v3258 = vsel %vm1481, %v3226, %v2658
      %v3259 = vsel %vm1481, %v3227, %v2660
      %v3260 = vsel %vm1481, %v3228, %v2662
      %v3261 = vsel %vm1481, %v3229, %v2664
      %v3262 = vsel %vm1514, %v3230, %v2704
      %v3263 = vsel %vm1514, %v3231, %v2706
      %v3264 = vsel %vm1514, %v3232, %v2708
      %v3265 = vsel %vm1514, %v3233, %v2710
      %v3266 = vsel %vm1514, %v3234, %v2712
      %v3267 = vsel %vm1514, %v3235, %v2714
      %v3268 = vsel %vm1514, %v3236, %v2716
      %v3269 = vsel %vm1514, %v3237, %v2718
      %v3270 = vsel %vm1514, %v3238, %v2720
      %v3271 = vsel %vm1514, %v3239, %v2722
      %v3272 = vsel %vm1514, %v3240, %v2724
      %v3273 = vsel %vm1514, %v3241, %v2726
      %v3274 = vsel %vm1514, %v3242, %v2728
      %v3275 = vsel %vm1514, %v3243, %v2730
      %v3276 = vsel %vm1514, %v3244, %v2732
      %v3277 = vsel %vm1514, %v3245, %v2734
      %v3278 = vsel %vm1514, %v3246, %v2736
      %v3279 = vsel %vm1514, %v3247, %v2738
      %v3280 = vsel %vm1514, %v3248, %v2740
      %v3281 = vsel %vm1514, %v3249, %v2742
      %v3282 = vsel %vm1514, %v3250, %v2744
      %v3283 = vsel %vm1514, %v3251, %v2746
      %v3284 = vsel %vm1514, %v3252, %v2748
      %v3285 = vsel %vm1514, %v3253, %v2750
      %v3286 = vsel %vm1514, %v3254, %v2752
      %v3287 = vsel %vm1514, %v3255, %v2754
      %v3288 = vsel %vm1514, %v3256, %v2756
      %v3289 = vsel %vm1514, %v3257, %v2758
      %v3290 = vsel %vm1514, %v3258, %v2760
      %v3291 = vsel %vm1514, %v3259, %v2762
      %v3292 = vsel %vm1514, %v3260, %v2764
      %v3293 = vsel %vm1514, %v3261, %v2766
      %v3294 = vsel %vm1547, %v3262, %v2805
      %v3295 = vsel %vm1547, %v3263, %v2807
      %v3296 = vsel %vm1547, %v3264, %v2809
      %v3297 = vsel %vm1547, %v3265, %v2811
      %v3298 = vsel %vm1547, %v3266, %v2813
      %v3299 = vsel %vm1547, %v3267, %v2815
      %v3300 = vsel %vm1547, %v3268, %v2817
      %v3301 = vsel %vm1547, %v3269, %v2819
      %v3302 = vsel %vm1547, %v3270, %v2821
      %v3303 = vsel %vm1547, %v3271, %v2823
      %v3304 = vsel %vm1547, %v3272, %v2825
      %v3305 = vsel %vm1547, %v3273, %v2827
      %v3306 = vsel %vm1547, %v3274, %v2829
      %v3307 = vsel %vm1547, %v3275, %v2831
      %v3308 = vsel %vm1547, %v3276, %v2833
      %v3309 = vsel %vm1547, %v3277, %v2835
      %v3310 = vsel %vm1547, %v3278, %v2837
      %v3311 = vsel %vm1547, %v3279, %v2839
      %v3312 = vsel %vm1547, %v3280, %v2841
      %v3313 = vsel %vm1547, %v3281, %v2843
      %v3314 = vsel %vm1547, %v3282, %v2845
      %v3315 = vsel %vm1547, %v3283, %v2847
      %v3316 = vsel %vm1547, %v3284, %v2849
      %v3317 = vsel %vm1547, %v3285, %v2851
      %v3318 = vsel %vm1547, %v3286, %v2853
      %v3319 = vsel %vm1547, %v3287, %v2855
      %v3320 = vsel %vm1547, %v3288, %v2857
      %v3321 = vsel %vm1547, %v3289, %v2859
      %v3322 = vsel %vm1547, %v3290, %v2861
      %v3323 = vsel %vm1547, %v3291, %v2863
      %v3324 = vsel %vm1547, %v3292, %v2865
      %v3325 = vsel %vm1547, %v3293, %v2867
      %v3326 = vsel %vm1580, %v3294, %v2901
      %v3327 = vsel %vm1580, %v3295, %v2903
      %v3328 = vsel %vm1580, %v3296, %v2905
      %v3329 = vsel %vm1580, %v3297, %v2907
      %v3330 = vsel %vm1580, %v3298, %v2909
      %v3331 = vsel %vm1580, %v3299, %v2911
      %v3332 = vsel %vm1580, %v3300, %v2913
      %v3333 = vsel %vm1580, %v3301, %v2915
      %v3334 = vsel %vm1580, %v3302, %v2917
      %v3335 = vsel %vm1580, %v3303, %v2919
      %v3336 = vsel %vm1580, %v3304, %v2921
      %v3337 = vsel %vm1580, %v3305, %v2923
      %v3338 = vsel %vm1580, %v3306, %v2925
      %v3339 = vsel %vm1580, %v3307, %v2927
      %v3340 = vsel %vm1580, %v3308, %v2929
      %v3341 = vsel %vm1580, %v3309, %v2931
      %v3342 = vsel %vm1580, %v3310, %v2933
      %v3343 = vsel %vm1580, %v3311, %v2935
      %v3344 = vsel %vm1580, %v3312, %v2937
      %v3345 = vsel %vm1580, %v3313, %v2939
      %v3346 = vsel %vm1580, %v3314, %v2941
      %v3347 = vsel %vm1580, %v3315, %v2943
      %v3348 = vsel %vm1580, %v3316, %v2945
      %v3349 = vsel %vm1580, %v3317, %v2947
      %v3350 = vsel %vm1580, %v3318, %v2949
      %v3351 = vsel %vm1580, %v3319, %v2951
      %v3352 = vsel %vm1580, %v3320, %v2953
      %v3353 = vsel %vm1580, %v3321, %v2955
      %v3354 = vsel %vm1580, %v3322, %v2957
      %v3355 = vsel %vm1580, %v3323, %v2959
      %v3356 = vsel %vm1580, %v3324, %v2953
      %v3357 = vsel %vm1580, %v3325, %v2955
      %v3358 = vsel %vm1613, %v3326, %v2991
      %v3359 = vsel %vm1613, %v3327, %v2993
      %v3360 = vsel %vm1613, %v3328, %v2995
      %v3361 = vsel %vm1613, %v3329, %v2997
      %v3362 = vsel %vm1613, %v3330, %v2999
      %v3363 = vsel %vm1613, %v3331, %v3001
      %v3364 = vsel %vm1613, %v3332, %v3003
      %v3365 = vsel %vm1613, %v3333, %v3005
      %v3366 = vsel %vm1613, %v3334, %v3007
      %v3367 = vsel %vm1613, %v3335, %v3009
      %v3368 = vsel %vm1613, %v3336, %v3011
      %v3369 = vsel %vm1613, %v3337, %v3013
      %v3370 = vsel %vm1613, %v3338, %v3015
      %v3371 = vsel %vm1613, %v3339, %v3017
      %v3372 = vsel %vm1613, %v3340, %v3019
      %v3373 = vsel %vm1613, %v3341, %v3021
      %v3374 = vsel %vm1613, %v3342, %v3023
      %v3375 = vsel %vm1613, %v3343, %v3025
      %v3376 = vsel %vm1613, %v3344, %v3027
      %v3377 = vsel %vm1613, %v3345, %v3029
      %v3378 = vsel %vm1613, %v3346, %v3031
      %v3379 = vsel %vm1613, %v3347, %v3033
      %v3380 = vsel %vm1613, %v3348, %v3035
      %v3381 = vsel %vm1613, %v3349, %v3037
      %v3382 = vsel %vm1613, %v3350, %v3039
      %v3383 = vsel %vm1613, %v3351, %v3041
      %v3384 = vsel %vm1613, %v3352, %v3043
      %v3385 = vsel %vm1613, %v3353, %v3045
      %v3386 = vsel %vm1613, %v3354, %v3047
      %v3387 = vsel %vm1613, %v3355, %v3049
      %v3388 = vsel %vm1613, %v3356, %v3043
      %v3389 = vsel %vm1613, %v3357, %v3045
      %v3390 = vsel %vm1646, %v3358, %v3081
      %v3391 = vsel %vm1646, %v3359, %v3083
      %v3392 = vsel %vm1646, %v3360, %v3085
      %v3393 = vsel %vm1646, %v3361, %v3087
      %v3394 = vsel %vm1646, %v3362, %v3089
      %v3395 = vsel %vm1646, %v3363, %v3091
      %v3396 = vsel %vm1646, %v3364, %v3093
      %v3397 = vsel %vm1646, %v3365, %v3095
      %v3398 = vsel %vm1646, %v3366, %v3097
      %v3399 = vsel %vm1646, %v3367, %v3099
      %v3400 = vsel %vm1646, %v3368, %v3101
      %v3401 = vsel %vm1646, %v3369, %v3103
      %v3402 = vsel %vm1646, %v3370, %v3105
      %v3403 = vsel %vm1646, %v3371, %v3107
      %v3404 = vsel %vm1646, %v3372, %v3109
      %v3405 = vsel %vm1646, %v3373, %v3111
      %v3406 = vsel %vm1646, %v3374, %v3113
      %v3407 = vsel %vm1646, %v3375, %v3115
      %v3408 = vsel %vm1646, %v3376, %v3117
      %v3409 = vsel %vm1646, %v3377, %v3119
      %v3410 = vsel %vm1646, %v3378, %v3121
      %v3411 = vsel %vm1646, %v3379, %v3123
      %v3412 = vsel %vm1646, %v3380, %v3125
      %v3413 = vsel %vm1646, %v3381, %v3127
      %v3414 = vsel %vm1646, %v3382, %v3129
      %v3415 = vsel %vm1646, %v3383, %v3131
      %v3416 = vsel %vm1646, %v3384, %v3133
      %v3417 = vsel %vm1646, %v3385, %v3135
      %v3418 = vsel %vm1646, %v3386, %v3137
      %v3419 = vsel %vm1646, %v3387, %v3139
      %v3420 = vsel %vm1646, %v3388, %v3133
      %v3421 = vsel %vm1646, %v3389, %v3135
      %v3423 = vlaneseq
      %v3424 = vshrl.u32 %v3423, 7
      %v3425 = vsub.s32 0, %v3424
      %v3426 = vrot.slane %v2016, %v3425
      %v3429 = vsel %vm1685, %v3390, 0
      %v3432 = vsel %vm1685, %v3391, 0
      %v3435 = vsel %vm1685, %v3392, 0
      %v3438 = vsel %vm1685, %v3393, 0
      %v3441 = vsel %vm1685, %v3394, 0
      %v3444 = vsel %vm1685, %v3395, 0
      %v3447 = vsel %vm1685, %v3396, 0
      %v3450 = vsel %vm1685, %v3397, 0
      %v3453 = vsel %vm1685, %v3398, 0
      %v3456 = vsel %vm1685, %v3399, 0
      %v3459 = vsel %vm1685, %v3400, 0
      %v3462 = vsel %vm1685, %v3401, 0
      %v3465 = vsel %vm1685, %v3402, 0
      %v3468 = vsel %vm1685, %v3403, 0
      %v3471 = vsel %vm1685, %v3404, 0
      %v3474 = vsel %vm1685, %v3405, 0
      %v3477 = vsel %vm1685, %v3406, 0
      %v3480 = vsel %vm1685, %v3407, 0
      %v3483 = vsel %vm1685, %v3408, 0
      %v3486 = vsel %vm1685, %v3409, 0
      %v3489 = vsel %vm1685, %v3410, 0
      %v3492 = vsel %vm1685, %v3411, 0
      %v3495 = vsel %vm1685, %v3412, 0
      %v3498 = vsel %vm1685, %v3413, 0
      %v3501 = vsel %vm1685, %v3414, 0
      %v3504 = vsel %vm1685, %v3415, 0
      %v3507 = vsel %vm1685, %v3416, 0
      %v3510 = vsel %vm1685, %v3417, 0
      %v3513 = vsel %vm1685, %v3418, 0
      %v3516 = vsel %vm1685, %v3419, 0
      %v3519 = vsel %vm1685, %v3420, 0
      %v3522 = vsel %vm1685, %v3421, 0
      %v3525 = vsel %vm1782, %v2015, 0
      %3527 = vmatprep.subr.mxu0 0.0
      %3528 = vmatpush1.msra.mxu0 %v2011
      %3529 = vmatprep.subr.mxu0 0.0
      %3530 = vmatpush1.msra.mxu0 %v2012
      %3531 = vmatprep.subr.mxu0 0.0
      %3532 = vmatpush1.msra.mxu0 %v2013
      %3533 = vmatprep.subr.mxu0 0.0
      %3534 = vmatpush1.msra.mxu0 %v2014
      %3535 = vmatprep.subr.mxu0 0.0
      %3536 = vmatpush1.msra.mxu0 %v3525
      %3537 = vmatprep.subr.mxu0 0.0
      %3538 = vmatpush1.msra.mxu0 0.0
      %3539 = vmatprep.subr.mxu0 0.0
      %3540 = vmatpush1.msra.mxu0 0.0
      %3541 = vmatprep.subr.mxu0 0.0
      %3542 = vmatpush1.msra.mxu0 0.0
      %3543 = vmatprep.subr.mxu0 0.0
      %3544 = vmatpush1.msra.mxu0 0.0
      %3545 = vmatprep.subr.mxu0 0.0
      %3546 = vmatpush1.msra.mxu0 0.0
      %3547 = vmatprep.subr.mxu0 0.0
      %3548 = vmatpush1.msra.mxu0 0.0
      %3549 = vmatprep.subr.mxu0 0.0
      %3550 = vmatpush1.msra.mxu0 0.0
      %3551 = vmatprep.subr.mxu0 0.0
      %3552 = vmatpush1.msra.mxu0 0.0
      %3553 = vmatprep.subr.mxu0 0.0
      %3554 = vmatpush1.msra.mxu0 0.0
      %3555 = vmatprep.subr.mxu0 0.0
      %3556 = vmatpush1.msra.mxu0 0.0
      %3557 = vmatprep.subr.mxu0 0.0
      %3558 = vmatpush1.msra.mxu0 0.0
      %3559 = vmatprep.subr.mxu0 0.0
      %3560 = vmatpush1.msra.mxu0 0.0
      %3561 = vmatprep.subr.mxu0 0.0
      %3562 = vmatpush1.msra.mxu0 0.0
      %3563 = vmatprep.subr.mxu0 0.0
      %3564 = vmatpush1.msra.mxu0 0.0
      %3565 = vmatprep.subr.mxu0 0.0
      %3566 = vmatpush1.msra.mxu0 0.0
      %3567 = vmatprep.subr.mxu0 0.0
      %3568 = vmatpush1.msra.mxu0 0.0
      %3569 = vmatprep.subr.mxu0 0.0
      %3570 = vmatpush1.msra.mxu0 0.0
      %3571 = vmatprep.subr.mxu0 0.0
      %3572 = vmatpush1.msra.mxu0 0.0
      %3573 = vmatprep.subr.mxu0 0.0
      %3574 = vmatpush1.msra.mxu0 0.0
      %3575 = vmatprep.subr.mxu0 0.0
      %3576 = vmatpush1.msra.mxu0 0.0
      %3577 = vmatprep.subr.mxu0 0.0
      %3578 = vmatpush1.msra.mxu0 0.0
      %3579 = vmatprep.subr.mxu0 0.0
      %3580 = vmatpush1.msra.mxu0 0.0
      %3581 = vmatprep.subr.mxu0 0.0
      %3582 = vmatpush1.msra.mxu0 0.0
      %3583 = vmatprep.subr.mxu0 0.0
      %3584 = vmatpush1.msra.mxu0 0.0
      %3585 = vmatprep.subr.mxu0 0.0
      %3586 = vmatpush1.msra.mxu0 0.0
      %3587 = vmatprep.subr.mxu0 0.0
      %3588 = vmatpush1.msra.mxu0 0.0
      %3589 = vmatprep.subr.mxu0 0.0
      %3590 = vmatpush1.msra.mxu0 0.0
      %3591 = vmatprep.mubr.f32.mxu0 0.0
      %3592 = vmatmul.mubr.f32.gmra.mrb[0].mxu0 %v3429
      %v3593 = vpop.f32.mrb[0].mxu0
      %v3594 = vadd.f32 %v3426, %v3593
      %v3595 = vpop.f32.mrb[0].mxu0
      %3596 = vmatprep.mubr.f32.mxu0 0.0
      %3597 = vmatmul.mubr.f32.gmra.mrb[0].mxu0 %v3432
      %v3598 = vpop.f32.mrb[0].mxu0
      %v3599 = vadd.f32 %v3426, %v3598
      %v3600 = vpop.f32.mrb[0].mxu0
      %3601 = vmatprep.mubr.f32.mxu0 0.0
      %3602 = vmatmul.mubr.f32.gmra.mrb[0].mxu0 %v3435
      %v3603 = vpop.f32.mrb[0].mxu0
      %v3604 = vadd.f32 %v3426, %v3603
      %v3605 = vpop.f32.mrb[0].mxu0
      %3606 = vmatprep.mubr.f32.mxu0 0.0
      %3607 = vmatmul.mubr.f32.gmra.mrb[0].mxu0 %v3438
      %v3608 = vpop.f32.mrb[0].mxu0
      %v3609 = vadd.f32 %v3426, %v3608
      %v3610 = vpop.f32.mrb[0].mxu0
      %3611 = vmatprep.mubr.f32.mxu0 0.0
      %3612 = vmatmul.mubr.f32.gmra.mrb[0].mxu0 %v3441
      %v3613 = vpop.f32.mrb[0].mxu0
      %v3614 = vadd.f32 %v3426, %v3613
      %v3615 = vpop.f32.mrb[0].mxu0
      %3616 = vmatprep.mubr.f32.mxu0 0.0
      %3617 = vmatmul.mubr.f32.gmra.mrb[0].mxu0 %v3444
      %v3618 = vpop.f32.mrb[0].mxu0
      %v3619 = vadd.f32 %v3426, %v3618
      %v3620 = vpop.f32.mrb[0].mxu0
      %3621 = vmatprep.mubr.f32.mxu0 0.0
      %3622 = vmatmul.mubr.f32.gmra.mrb[0].mxu0 %v3447
      %v3623 = vpop.f32.mrb[0].mxu0
      %v3624 = vadd.f32 %v3426, %v3623
      %v3625 = vpop.f32.mrb[0].mxu0
      %3626 = vmatprep.mubr.f32.mxu0 0.0
      %3627 = vmatmul.mubr.f32.gmra.mrb[0].mxu0 %v3450
      %v3628 = vpop.f32.mrb[0].mxu0
      %v3629 = vadd.f32 %v3426, %v3628
      %v3630 = vpop.f32.mrb[0].mxu0
      %3631 = vmatprep.mubr.f32.mxu0 0.0
      %3632 = vmatmul.mubr.f32.gmra.mrb[0].mxu0 %v3453
      %v3633 = vpop.f32.mrb[0].mxu0
      %v3634 = vadd.f32 %v3426, %v3633
      %v3635 = vpop.f32.mrb[0].mxu0
      %3636 = vmatprep.mubr.f32.mxu0 0.0
      %3637 = vmatmul.mubr.f32.gmra.mrb[0].mxu0 %v3456
      %v3638 = vpop.f32.mrb[0].mxu0
      %v3639 = vadd.f32 %v3426, %v3638
      %v3640 = vpop.f32.mrb[0].mxu0
      %3641 = vmatprep.mubr.f32.mxu0 0.0
      %3642 = vmatmul.mubr.f32.gmra.mrb[0].mxu0 %v3459
      %v3643 = vpop.f32.mrb[0].mxu0
      %v3644 = vadd.f32 %v3426, %v3643
      %v3645 = vpop.f32.mrb[0].mxu0
      %3646 = vmatprep.mubr.f32.mxu0 0.0
      %3647 = vmatmul.mubr.f32.gmra.mrb[0].mxu0 %v3462
      %v3648 = vpop.f32.mrb[0].mxu0
      %v3649 = vadd.f32 %v3426, %v3648
      %v3650 = vpop.f32.mrb[0].mxu0
      %3651 = vmatprep.mubr.f32.mxu0 0.0
      %3652 = vmatmul.mubr.f32.gmra.mrb[0].mxu0 %v3465
      %v3653 = vpop.f32.mrb[0].mxu0
      %v3654 = vadd.f32 %v3426, %v3653
      %v3655 = vpop.f32.mrb[0].mxu0
      %3656 = vmatprep.mubr.f32.mxu0 0.0
      %3657 = vmatmul.mubr.f32.gmra.mrb[0].mxu0 %v3468
      %v3658 = vpop.f32.mrb[0].mxu0
      %v3659 = vadd.f32 %v3426, %v3658
      %v3660 = vpop.f32.mrb[0].mxu0
      %3661 = vmatprep.mubr.f32.mxu0 0.0
      %3662 = vmatmul.mubr.f32.gmra.mrb[0].mxu0 %v3471
      %v3663 = vpop.f32.mrb[0].mxu0
      %v3664 = vadd.f32 %v3426, %v3663
      %v3665 = vpop.f32.mrb[0].mxu0
      %3666 = vmatprep.mubr.f32.mxu0 0.0
      %3667 = vmatmul.mubr.f32.gmra.mrb[0].mxu0 %v3474
      %v3668 = vpop.f32.mrb[0].mxu0
      %v3669 = vadd.f32 %v3426, %v3668
      %v3670 = vpop.f32.mrb[0].mxu0
      %3671 = vmatprep.mubr.f32.mxu0 0.0
      %3672 = vmatmul.mubr.f32.gmra.mrb[0].mxu0 %v3477
      %v3673 = vpop.f32.mrb[0].mxu0
      %v3674 = vadd.f32 %v3426, %v3673
      %v3675 = vpop.f32.mrb[0].mxu0
      %3676 = vmatprep.mubr.f32.mxu0 0.0
      %3677 = vmatmul.mubr.f32.gmra.mrb[0].mxu0 %v3480
      %v3678 = vpop.f32.mrb[0].mxu0
      %v3679 = vadd.f32 %v3426, %v3678
      %v3680 = vpop.f32.mrb[0].mxu0
      %3681 = vmatprep.mubr.f32.mxu0 0.0
      %3682 = vmatmul.mubr.f32.gmra.mrb[0].mxu0 %v3483
      %v3683 = vpop.f32.mrb[0].mxu0
      %v3684 = vadd.f32 %v3426, %v3683
      %v3685 = vpop.f32.mrb[0].mxu0
      %3686 = vmatprep.mubr.f32.mxu0 0.0
      %3687 = vmatmul.mubr.f32.gmra.mrb[0].mxu0 %v3486
      %v3688 = vpop.f32.mrb[0].mxu0
      %v3689 = vadd.f32 %v3426, %v3688
      %v3690 = vpop.f32.mrb[0].mxu0
      %3691 = vmatprep.mubr.f32.mxu0 0.0
      %3692 = vmatmul.mubr.f32.gmra.mrb[0].mxu0 %v3489
      %v3693 = vpop.f32.mrb[0].mxu0
      %v3694 = vadd.f32 %v3426, %v3693
      %v3695 = vpop.f32.mrb[0].mxu0
      %3696 = vmatprep.mubr.f32.mxu0 0.0
      %3697 = vmatmul.mubr.f32.gmra.mrb[0].mxu0 %v3492
      %v3698 = vpop.f32.mrb[0].mxu0
      %v3699 = vadd.f32 %v3426, %v3698
      %v3700 = vpop.f32.mrb[0].mxu0
      %3701 = vmatprep.mubr.f32.mxu0 0.0
      %3702 = vmatmul.mubr.f32.gmra.mrb[0].mxu0 %v3495
      %v3703 = vpop.f32.mrb[0].mxu0
      %v3704 = vadd.f32 %v3426, %v3703
      %v3705 = vpop.f32.mrb[0].mxu0
      %3706 = vmatprep.mubr.f32.mxu0 0.0
      %3707 = vmatmul.mubr.f32.gmra.mrb[0].mxu0 %v3498
      %v3708 = vpop.f32.mrb[0].mxu0
      %v3709 = vadd.f32 %v3426, %v3708
      %v3710 = vpop.f32.mrb[0].mxu0
      %3711 = vmatprep.mubr.f32.mxu0 0.0
      %3712 = vmatmul.mubr.f32.gmra.mrb[0].mxu0 %v3501
      %v3713 = vpop.f32.mrb[0].mxu0
      %v3714 = vadd.f32 %v3426, %v3713
      %v3715 = vpop.f32.mrb[0].mxu0
      %3716 = vmatprep.mubr.f32.mxu0 0.0
      %3717 = vmatmul.mubr.f32.gmra.mrb[0].mxu0 %v3504
      %v3718 = vpop.f32.mrb[0].mxu0
      %v3719 = vadd.f32 %v3426, %v3718
      %v3720 = vpop.f32.mrb[0].mxu0
      %3721 = vmatprep.mubr.f32.mxu0 0.0
      %3722 = vmatmul.mubr.f32.gmra.mrb[0].mxu0 %v3507
      %v3723 = vpop.f32.mrb[0].mxu0
      %v3724 = vadd.f32 %v3426, %v3723
      %v3725 = vpop.f32.mrb[0].mxu0
      %3726 = vmatprep.mubr.f32.mxu0 0.0
      %3727 = vmatmul.mubr.f32.gmra.mrb[0].mxu0 %v3510
      %v3728 = vpop.f32.mrb[0].mxu0
      %v3729 = vadd.f32 %v3426, %v3728
      %v3730 = vpop.f32.mrb[0].mxu0
      %3731 = vmatprep.mubr.f32.mxu0 0.0
      %3732 = vmatmul.mubr.f32.gmra.mrb[0].mxu0 %v3513
      %v3733 = vpop.f32.mrb[0].mxu0
      %v3734 = vadd.f32 %v3426, %v3733
      %v3735 = vpop.f32.mrb[0].mxu0
      %3736 = vmatprep.mubr.f32.mxu0 0.0
      %3737 = vmatmul.mubr.f32.gmra.mrb[0].mxu0 %v3516
      %v3738 = vpop.f32.mrb[0].mxu0
      %v3739 = vadd.f32 %v3426, %v3738
      %v3740 = vpop.f32.mrb[0].mxu0
      %3741 = vmatprep.mubr.f32.mxu0 0.0
      %3742 = vmatmul.mubr.f32.gmra.mrb[0].mxu0 %v3519
      %v3743 = vpop.f32.mrb[0].mxu0
      %v3744 = vadd.f32 %v3426, %v3743
      %v3745 = vpop.f32.mrb[0].mxu0
      %3746 = vmatprep.mubr.f32.mxu0 0.0
      %3747 = vmatmul.mubr.f32.gmra.mrb[0].mxu0 %v3522
      %v3748 = vpop.f32.mrb[0].mxu0
      %v3749 = vadd.f32 %v3426, %v3748
      %v3750 = vpop.f32.mrb[0].mxu0
      %3751 = vdwg.mxu0
      %v3752 = vadd.f32 %v3594, %v225
      %v3753 = vadd.f32 %v3599, %v226
      %v3754 = vadd.f32 %v3604, %v227
      %v3755 = vadd.f32 %v3609, %v228
      %v3756 = vadd.f32 %v3614, %v229
      %v3757 = vadd.f32 %v3619, %v230
      %v3758 = vadd.f32 %v3624, %v231
      %v3759 = vadd.f32 %v3629, %v232
      %v3760 = vadd.f32 %v3634, %v233
      %v3761 = vadd.f32 %v3639, %v234
      %v3762 = vadd.f32 %v3644, %v235
      %v3763 = vadd.f32 %v3649, %v236
      %v3764 = vadd.f32 %v3654, %v237
      %v3765 = vadd.f32 %v3659, %v238
      %v3766 = vadd.f32 %v3664, %v239
      %v3767 = vadd.f32 %v3669, %v240
      %v3768 = vadd.f32 %v3674, %v241
      %v3769 = vadd.f32 %v3679, %v242
      %v3770 = vadd.f32 %v3684, %v243
      %v3771 = vadd.f32 %v3689, %v244
      %v3772 = vadd.f32 %v3694, %v245
      %v3773 = vadd.f32 %v3699, %v246
      %v3774 = vadd.f32 %v3704, %v247
      %v3775 = vadd.f32 %v3709, %v248
      %v3776 = vadd.f32 %v3714, %v249
      %v3777 = vadd.f32 %v3719, %v250
      %v3778 = vadd.f32 %v3724, %v251
      %v3779 = vadd.f32 %v3729, %v252
      %v3780 = vadd.f32 %v3734, %v253
      %v3781 = vadd.f32 %v3739, %v254
      %v3782 = vadd.f32 %v3744, %v255
      %v3783 = vadd.f32 %v3749, %v256
      %3784 = vst.msk [vmem:[%s224] sm:$0xff] %vm1419, %v3752
      %3785 = vst.msk [vmem:[%s224 + $0x8] sm:$0xff] %vm1419, %v3753
      %3786 = vst.msk [vmem:[%s224 + $0x10] sm:$0xff] %vm1419, %v3754
      %3787 = vst.msk [vmem:[%s224 + $0x18] sm:$0xff] %vm1419, %v3755
      %3788 = vst.msk [vmem:[%s224 + $0x20] sm:$0xff] %vm1419, %v3756
      %3789 = vst.msk [vmem:[%s224 + $0x28] sm:$0xff] %vm1419, %v3757
      %3790 = vst.msk [vmem:[%s224 + $0x30] sm:$0xff] %vm1419, %v3758
      %3791 = vst.msk [vmem:[%s224 + $0x38] sm:$0xff] %vm1419, %v3759
      %3792 = vst.msk [vmem:[%s224 + $0x40] sm:$0xff] %vm1419, %v3760
      %3793 = vst.msk [vmem:[%s224 + $0x48] sm:$0xff] %vm1419, %v3761
      %3794 = vst.msk [vmem:[%s224 + $0x50] sm:$0xff] %vm1419, %v3762
      %3795 = vst.msk [vmem:[%s224 + $0x58] sm:$0xff] %vm1419, %v3763
      %3796 = vst.msk [vmem:[%s224 + $0x60] sm:$0xff] %vm1419, %v3764
      %3797 = vst.msk [vmem:[%s224 + $0x68] sm:$0xff] %vm1419, %v3765
      %3798 = vst.msk [vmem:[%s224 + $0x70] sm:$0xff] %vm1419, %v3766
      %3799 = vst.msk [vmem:[%s224 + $0x78] sm:$0xff] %vm1419, %v3767
      %3800 = vst.msk [vmem:[%s224 + $0x80] sm:$0xff] %vm1419, %v3768
      %3801 = vst.msk [vmem:[%s224 + $0x88] sm:$0xff] %vm1419, %v3769
      %3802 = vst.msk [vmem:[%s224 + $0x90] sm:$0xff] %vm1419, %v3770
      %3803 = vst.msk [vmem:[%s224 + $0x98] sm:$0xff] %vm1419, %v3771
      %3804 = vst.msk [vmem:[%s224 + $0xa0] sm:$0xff] %vm1419, %v3772
      %3805 = vst.msk [vmem:[%s224 + $0xa8] sm:$0xff] %vm1419, %v3773
      %3806 = vst.msk [vmem:[%s224 + $0xb0] sm:$0xff] %vm1419, %v3774
      %3807 = vst.msk [vmem:[%s224 + $0xb8] sm:$0xff] %vm1419, %v3775
      %3808 = vst.msk [vmem:[%s224 + $0xc0] sm:$0xff] %vm1419, %v3776
      %3809 = vst.msk [vmem:[%s224 + $0xc8] sm:$0xff] %vm1419, %v3777
      %3810 = vst.msk [vmem:[%s224 + $0xd0] sm:$0xff] %vm1419, %v3778
      %3811 = vst.msk [vmem:[%s224 + $0xd8] sm:$0xff] %vm1419, %v3779
      %3812 = vst.msk [vmem:[%s224 + $0xe0] sm:$0xff] %vm1419, %v3780
      %3813 = vst.msk [vmem:[%s224 + $0xe8] sm:$0xff] %vm1419, %v3781
      %3814 = vst.msk [vmem:[%s224 + $0xf0] sm:$0xff] %vm1419, %v3782
      %3815 = vst.msk [vmem:[%s224 + $0xf8] sm:$0xff] %vm1419, %v3783
      %p3816 = scmp.lt.s32.totalorder %s16, 1
      %s3817 = scalar_select %p3816, %s16, 1
      %s3818 = smul.addr %s3817, 32
      %s3819 = smul.addr %s3818, 8
      %s3820 = scalar_lea.vmem %s5, %s3819
      // Predicated region
      $region41: #{residual_block_forward.1} parent=39 // pred_check
        %p3821 = pneg %p144
      $region42: #{residual_block_forward.1} parent=39 // pred_check_branch
        %3823 = sbr.rel (%p3821) target = $region44
      $region43: #{residual_block_forward.1} parent=39 // pred_region
        _
      $region44: #{residual_block_forward.1} parent=39 // pred_fallthru
        _
    $region40: #{residual_block_forward.1} parent=5 // pred_fallthru
      _
    %p3824 = scmp.le.s32.totalorder 2, %s11
    // Predicated region
    $region45: #{residual_block_forward.1} parent=5 // pred_check
      %p3825 = pneg %p3824
    $region46: #{residual_block_forward.1} parent=5 // pred_check_branch
      %3827 = sbr.rel (%p3825) target = $region48
    $region47: #{residual_block_forward.1} parent=5 // pred_region
      %s3828 = ssub.s32 %s11, 2
      // Predicated region
      $region49: #{residual_block_forward.1} parent=47 // pred_check
        %p3829 = pneg %p150
      $region50: #{residual_block_forward.1} parent=47 // pred_check_branch
        %3831 = sbr.rel (%p3829) target = $region52
      $region51: #{residual_block_forward.1} parent=47 // pred_region
        %p3832 = scmp.lt.s32.totalorder %s17, 1
        %s3833 = scalar_select %p3832, %s17, 1
        %s3834 = smul.addr %s3833, 32
        %s3835 = smul.addr %s3834, 8
        %s3836 = scalar_lea.vmem %s5, %s3835
      $region52: #{residual_block_forward.1} parent=47 // pred_fallthru
        _
    $region48: #{residual_block_forward.1} parent=5 // pred_fallthru
      _
  $region6: #{residual_block_forward.1} parent=0 // loop_footer
    %s15 = sadd.s32 1, %s11
  $region7: #{residual_block_forward.1} parent=0 // loop_footer_branch
    %10 = sbr.rel target = $region3
  $region8: #{residual_block_forward.1} parent=0 // loop_exit
    _

</llo_original>
